<compile_context>
chip_gen: v7x
topology: tpu7x:2x2x1
jax: 0.10.0
libtpu: 0.0.40
codegen_flags: <defaults>
</compile_context>

<pallas_src>
import math
import functools

import jax
import jax.numpy as jnp
from jax.experimental import pallas as pl
from jax.experimental.pallas import tpu as pltpu


def _mha_kernel(x_ref, wqkv_ref, bqkv_ref, wo_ref, bo_ref,
                out_ref, asum_ref, amask_ref,
                qkv_ref,
                *, n_heads: int, d_k: int, threshold: float, tq: int):
    d = n_heads * d_k
    seq = x_ref.shape[1]
    qi = pl.program_id(1)
    inv_sqrt_dk = 1.0 / math.sqrt(d_k)

    # Fused QKV projection: one [S, D] @ [D, 3D] MXU matmul, computed once per
    # batch element (first query tile) and carried in VMEM for the other tiles.
    @pl.when(qi == 0)
    def _():
        x = x_ref[0]                                                    # [S, D]
        qkv_ref[...] = (jnp.dot(x, wqkv_ref[...],
                                preferred_element_type=jnp.float32)
                        + bqkv_ref[0])

    q_start = pl.multiple_of(qi * tq, tq)
    q = qkv_ref[pl.ds(q_start, tq), 0:d]                                # [TQ, D]
    k = qkv_ref[:, d:2 * d]                                             # [S,  D]
    v = qkv_ref[:, 2 * d:3 * d]                                         # [S,  D]

    # Split heads (batched over H; no Python head loop).
    qh = q.reshape(tq, n_heads, d_k)                                    # [TQ, H, dk]
    kh = k.reshape(seq, n_heads, d_k)                                   # [S,  H, dk]
    vh = v.reshape(seq, n_heads, d_k)                                   # [S,  H, dk]

    # scores[h, q, s] = (Q_h K_h^T) / sqrt(d_k)
    scores = jnp.einsum('qhd,khd->hqk', qh, kh,
                        preferred_element_type=jnp.float32) * inv_sqrt_dk   # [H, TQ, S]

    # Softmax over keys (exact reciprocal to preserve threshold semantics).
    m = jnp.max(scores, axis=-1, keepdims=True)
    e = jnp.exp(scores - m)
    denom = jnp.sum(e, axis=-1, keepdims=True)
    probs = e * pl.reciprocal(denom, approx=False)                      # [H, TQ, S]

    # Sparsify: zero probabilities below threshold.
    keep = probs >= threshold
    probs_model = jnp.where(keep, probs, 0.0)

    # Weighted values for all heads, merged back to a lane-dense [TQ, D] slab.
    merged = jnp.einsum('hqk,khd->qhd', probs_model, vh,
                        preferred_element_type=jnp.float32).reshape(tq, d)  # [TQ, D]

    out = jnp.dot(merged, wo_ref[...],
                  preferred_element_type=jnp.float32) + bo_ref[0]       # [TQ, D]

    out_ref[0] = out.astype(out_ref.dtype)
    asum_ref[0] = jnp.sum(probs, axis=0).astype(asum_ref.dtype)         # [TQ, S]
    amask_ref[0] = jnp.sum(keep.astype(jnp.float32),
                           axis=0).astype(amask_ref.dtype)              # [TQ, S]


def _pick_query_tile(seq_len: int) -> int:
    for cand in (256, 128):
        if seq_len % cand == 0:
            return cand
    return seq_len  # small / odd sequences: single tile


def multi_head_attention(x, params, *, n_heads: int, threshold: float, tq=None):
    """x: [B, S, D] float32. params: fused pre-transposed weights + biases."""
    B, S, D = x.shape
    assert D % n_heads == 0
    d_k = D // n_heads
    if tq is None:
        tq = _pick_query_tile(S)
    assert S % tq == 0, f"seq_length {S} must be divisible by query tile {tq}"
    n_q = S // tq

    kernel = functools.partial(_mha_kernel, n_heads=n_heads, d_k=d_k,
                               threshold=threshold, tq=tq)

    out_shapes = (
        jax.ShapeDtypeStruct((B, S, D), jnp.float32),  # output
        jax.ShapeDtypeStruct((B, S, S), jnp.float32),  # attention_sum
        jax.ShapeDtypeStruct((B, S, S), jnp.float32),  # attention_mask
    )

    # Explicit VMEM budget (f32 bytes): pipelined tiles + weights + QKV carry.
    est_bytes = 4 * (
        2 * S * D                     # x block (double-buffered)
        + D * 3 * D + 3 * D           # fused QKV weight + bias
        + D * D + D                   # output projection weight + bias
        + S * 3 * D                   # carried QKV scratch
        + 2 * (tq * D + 2 * tq * S)   # out / asum / amask tiles (double-buffered)
    )
    vmem_limit = int(min(max(2 * est_bytes, 32 * 2**20), 64 * 2**20))  # v7x-safe cap

    return pl.pallas_call(
        kernel,
        out_shape=out_shapes,
        grid_spec=pltpu.PrefetchScalarGridSpec(
            num_scalar_prefetch=0,
            grid=(B, n_q),
            in_specs=[
                pl.BlockSpec((1, S, D), lambda b, q: (b, 0, 0)),       # x (full seq per batch)
                pl.BlockSpec((D, 3 * D), lambda b, q: (0, 0)),         # W_qkv (fused)
                pl.BlockSpec((1, 3 * D), lambda b, q: (0, 0)),         # b_qkv (fused)
                pl.BlockSpec((D, D), lambda b, q: (0, 0)),             # W_o
                pl.BlockSpec((1, D), lambda b, q: (0, 0)),             # b_o
            ],
            out_specs=[
                pl.BlockSpec((1, tq, D), lambda b, q: (b, q, 0)),      # output tile
                pl.BlockSpec((1, tq, S), lambda b, q: (b, q, 0)),      # attention_sum tile
                pl.BlockSpec((1, tq, S), lambda b, q: (b, q, 0)),      # attention_mask tile
            ],
            scratch_shapes=[pltpu.VMEM((S, 3 * D), jnp.float32)],      # carried QKV
        ),
        compiler_params=pltpu.CompilerParams(
            # Query axis is "arbitrary" (sequential) because the QKV scratch is
            # carried across query tiles of a batch element; batch shards across cores.
            dimension_semantics=("parallel", "arbitrary"),
            vmem_limit_bytes=vmem_limit),
    )(x, params["w_qkv"], params["b_qkv"], params["w_o"], params["b_o"])


def init_params(key, d_model):
    """Deterministic synthetic parameters.

    Individual projection weights are generated as [D_in, D_out] (i.e. W^T of the
    PyTorch nn.Linear weight) and then fused into a single [D, 3D] QKV weight.
    """
    keys = jax.random.split(key, 8)
    scale = 1.0 / math.sqrt(d_model)

    def w(k):
        return jax.random.uniform(k, (d_model, d_model), jnp.float32,
                                  minval=-scale, maxval=scale)

    def b(k):
        return jax.random.uniform(k, (1, d_model), jnp.float32,
                                  minval=-scale, maxval=scale)

    wq, bq = w(keys[0]), b(keys[1])
    wk, bk = w(keys[2]), b(keys[3])
    wv, bv = w(keys[4]), b(keys[5])
    wo, bo = w(keys[6]), b(keys[7])
    return {
        "w_qkv": jnp.concatenate([wq, wk, wv], axis=1),   # [D, 3D]
        "b_qkv": jnp.concatenate([bq, bk, bv], axis=1),   # [1, 3D]
        "w_o": wo,                                        # [D, D]
        "b_o": bo,                                        # [1, D]
    }


if __name__ == "__main__":
    B, S, D = 2, 8, 32
    n_heads = 4
    threshold = 0.1

    key = jax.random.PRNGKey(0)
    kx, kp = jax.random.split(key)
    x = jax.random.normal(kx, (B, S, D), dtype=jnp.float32)
    params = init_params(kp, D)

    out, attn_sum, attn_mask = multi_head_attention(
        x, params, n_heads=n_heads, threshold=threshold)
    jax.block_until_ready((out, attn_sum, attn_mask))

    assert out.shape == (B, S, D)
    assert attn_sum.shape == (B, S, S)
    assert attn_mask.shape == (B, S, S)
    assert bool(jnp.all(jnp.isfinite(out)))
    assert bool(jnp.all(attn_mask >= 0.0)) and bool(jnp.all(attn_mask <= n_heads))
    print("KERNEL_OK")
</pallas_src>

<mosaic_0001>
module attributes {stable_mosaic.version = 11 : i64} {
  func.func @_mha_kernel(%arg0: i32, %arg1: i32, %arg2: memref<1x8x32xf32, #tpu.memory_space<vmem>>, %arg3: memref<32x96xf32, #tpu.memory_space<vmem>>, %arg4: memref<1x96xf32, #tpu.memory_space<vmem>>, %arg5: memref<32x32xf32, #tpu.memory_space<vmem>>, %arg6: memref<1x32xf32, #tpu.memory_space<vmem>>, %arg7: memref<1x8x32xf32, #tpu.memory_space<vmem>>, %arg8: memref<1x8x8xf32, #tpu.memory_space<vmem>>, %arg9: memref<1x8x8xf32, #tpu.memory_space<vmem>>, %arg10: memref<8x96xf32, #tpu.memory_space<vmem>>) attributes {dimension_semantics = [#tpu.dimension_semantics<parallel>, #tpu.dimension_semantics<arbitrary>], iteration_bounds = array<i64: 2, 1>, scalar_prefetch = 0 : i64, scratch_operands = 1 : i64, tpu.core_type = #tpu.core_type<tc>, window_params = [{transform_indices = @transform_0, window_bounds = array<i64: 1, 8, 32>}, {pipeline_mode = #tpu.pipeline_mode<synchronous>, transform_indices = @transform_1, window_bounds = array<i64: 32, 96>}, {pipeline_mode = #tpu.pipeline_mode<synchronous>, transform_indices = @transform_2, window_bounds = array<i64: 1, 96>}, {pipeline_mode = #tpu.pipeline_mode<synchronous>, transform_indices = @transform_3, window_bounds = array<i64: 32, 32>}, {pipeline_mode = #tpu.pipeline_mode<synchronous>, transform_indices = @transform_4, window_bounds = array<i64: 1, 32>}, {transform_indices = @transform_5, window_bounds = array<i64: 1, 8, 32>}, {transform_indices = @transform_6, window_bounds = array<i64: 1, 8, 8>}, {transform_indices = @transform_7, window_bounds = array<i64: 1, 8, 8>}]} {
    %c0_i32 = arith.constant 0 : i32
    %0 = arith.cmpi eq, %arg1, %c0_i32 : i32
    %1 = arith.extui %0 : i1 to i32
    %c0_i32_0 = arith.constant 0 : i32
    %2 = arith.cmpi ne, %1, %c0_i32_0 : i32
    scf.if %2 {
      %c0_25 = arith.constant 0 : index
      %c0_26 = arith.constant 0 : index
      %c0_27 = arith.constant 0 : index
      %52 = vector.load %arg2[%c0_25, %c0_26, %c0_27] : memref<1x8x32xf32, #tpu.memory_space<vmem>>, vector<1x8x32xf32>
      %53 = vector.shape_cast %52 : vector<1x8x32xf32> to vector<8x32xf32>
      %c0_28 = arith.constant 0 : index
      %c0_29 = arith.constant 0 : index
      %54 = vector.load %arg3[%c0_28, %c0_29] : memref<32x96xf32, #tpu.memory_space<vmem>>, vector<32x96xf32>
      %cst_30 = arith.constant dense<0.000000e+00> : vector<8x96xf32>
      %55 = tpu.matmul %53, %54, %cst_30 {dimension_numbers = #tpu.dot_dimension_numbers<[1], [0], [0], [1], [0, 0, 1, 1], [], []>} : vector<8x32xf32>, vector<32x96xf32>, vector<8x96xf32> -> vector<8x96xf32>
      %c0_31 = arith.constant 0 : index
      %c0_32 = arith.constant 0 : index
      %56 = vector.load %arg4[%c0_31, %c0_32] : memref<1x96xf32, #tpu.memory_space<vmem>>, vector<1x96xf32>
      %57 = vector.shape_cast %56 : vector<1x96xf32> to vector<96xf32>
      %58 = vector.shape_cast %57 : vector<96xf32> to vector<1x96xf32>
      %59 = vector.broadcast %58 : vector<1x96xf32> to vector<8x96xf32>
      %60 = arith.addf %55, %59 : vector<8x96xf32>
      %c0_33 = arith.constant 0 : index
      %c0_34 = arith.constant 0 : index
      %61 = vector.load %arg10[%c0_33, %c0_34] : memref<8x96xf32, #tpu.memory_space<vmem>>, vector<8x96xf32>
      tpu.vector_store %arg10[%c0_33, %c0_34], %60 {strides = array<i32>} : memref<8x96xf32, #tpu.memory_space<vmem>>, vector<8x96xf32>,
    } else {
    }
    %c8_i32 = arith.constant 8 : i32
    %3 = arith.muli %arg1, %c8_i32 : i32
    %4 = tpu.assume_multiple %3, 8 : i32
    %5 = arith.index_cast %4 : i32 to index
    %c0 = arith.constant 0 : index
    %6 = vector.load %arg10[%5, %c0] : memref<8x96xf32, #tpu.memory_space<vmem>>, vector<8x32xf32>
    %c0_1 = arith.constant 0 : index
    %c32 = arith.constant 32 : index
    %7 = vector.load %arg10[%c0_1, %c32] : memref<8x96xf32, #tpu.memory_space<vmem>>, vector<8x32xf32>
    %c0_2 = arith.constant 0 : index
    %c64 = arith.constant 64 : index
    %8 = vector.load %arg10[%c0_2, %c64] : memref<8x96xf32, #tpu.memory_space<vmem>>, vector<8x32xf32>
    %9 = vector.shape_cast %6 : vector<8x32xf32> to vector<8x4x8xf32>
    %10 = vector.shape_cast %7 : vector<8x32xf32> to vector<8x4x8xf32>
    %11 = vector.shape_cast %8 : vector<8x32xf32> to vector<8x4x8xf32>
    "tpu.trace_start"() <{level = 10 : i32, message = "qhd,khd->hqk"}> : () -> ()
    %cst = arith.constant dense<0.000000e+00> : vector<4x8x8xf32>
    %12 = tpu.matmul %9, %10, %cst {dimension_numbers = #tpu.dot_dimension_numbers<[2], [2], [0], [0], [0, 1, 0, 0, 1, 0], [1], [1]>} : vector<8x4x8xf32>, vector<8x4x8xf32>, vector<4x8x8xf32> -> vector<4x8x8xf32>
    "tpu.trace_stop"() : () -> ()
    %cst_3 = arith.constant 0.353553385 : f32
    %13 = vector.broadcast %cst_3 : f32 to vector<4x8x8xf32>
    %14 = arith.mulf %12, %13 : vector<4x8x8xf32>
    %cst_4 = arith.constant dense<0xFF800000> : vector<4x8xf32>
    %15 = vector.multi_reduction <maximumf>, %14, %cst_4 [2] : vector<4x8x8xf32> to vector<4x8xf32>
    %16 = vector.shape_cast %15 : vector<4x8xf32> to vector<4x8x1xf32>
    %17 = vector.broadcast %16 : vector<4x8x1xf32> to vector<4x8x8xf32>
    %18 = arith.subf %14, %17 : vector<4x8x8xf32>
    %19 = math.exp %18 : vector<4x8x8xf32>
    %cst_5 = arith.constant dense<0.000000e+00> : vector<4x8xf32>
    %20 = vector.multi_reduction <add>, %19, %cst_5 [2] : vector<4x8x8xf32> to vector<4x8xf32>
    %21 = vector.shape_cast %20 : vector<4x8xf32> to vector<4x8x1xf32>
    %22 = tpu.reciprocal %21 : vector<4x8x1xf32> -> vector<4x8x1xf32>
    %23 = vector.broadcast %22 : vector<4x8x1xf32> to vector<4x8x8xf32>
    %24 = arith.mulf %19, %23 : vector<4x8x8xf32>
    %cst_6 = arith.constant 1.000000e-01 : f32
    %25 = vector.broadcast %cst_6 : f32 to vector<4x8x8xf32>
    %26 = arith.cmpf oge, %24, %25 : vector<4x8x8xf32>
    %cst_7 = arith.constant 0.000000e+00 : f32
    %27 = vector.broadcast %cst_7 : f32 to vector<4x8x8xf32>
    %28 = arith.select %26, %24, %27 : vector<4x8x8xi1>, vector<4x8x8xf32>
    "tpu.trace_start"() <{level = 10 : i32, message = "hqk,khd->qhd"}> : () -> ()
    %cst_8 = arith.constant dense<0.000000e+00> : vector<4x8x8xf32>
    %29 = tpu.matmul %11, %28, %cst_8 {dimension_numbers = #tpu.dot_dimension_numbers<[0], [2], [2], [1], [0, 1, 0, 2, 1, 1], [1], [0]>} : vector<8x4x8xf32>, vector<4x8x8xf32>, vector<4x8x8xf32> -> vector<4x8x8xf32>
    %30 = tpu.transpose %29, [2, 0, 1] : vector<4x8x8xf32> -> vector<8x4x8xf32>
    "tpu.trace_stop"() : () -> ()
    %31 = vector.shape_cast %30 : vector<8x4x8xf32> to vector<8x32xf32>
    %c0_9 = arith.constant 0 : index
    %c0_10 = arith.constant 0 : index
    %32 = vector.load %arg5[%c0_9, %c0_10] : memref<32x32xf32, #tpu.memory_space<vmem>>, vector<32x32xf32>
    %cst_11 = arith.constant dense<0.000000e+00> : vector<8x32xf32>
    %33 = tpu.matmul %31, %32, %cst_11 {dimension_numbers = #tpu.dot_dimension_numbers<[1], [0], [0], [1], [0, 0, 1, 1], [], []>} : vector<8x32xf32>, vector<32x32xf32>, vector<8x32xf32> -> vector<8x32xf32>
    %c0_12 = arith.constant 0 : index
    %c0_13 = arith.constant 0 : index
    %34 = vector.load %arg6[%c0_12, %c0_13] : memref<1x32xf32, #tpu.memory_space<vmem>>, vector<1x32xf32>
    %35 = vector.shape_cast %34 : vector<1x32xf32> to vector<32xf32>
    %36 = vector.shape_cast %35 : vector<32xf32> to vector<1x32xf32>
    %37 = vector.broadcast %36 : vector<1x32xf32> to vector<8x32xf32>
    %38 = arith.addf %33, %37 : vector<8x32xf32>
    %c0_14 = arith.constant 0 : index
    %c0_15 = arith.constant 0 : index
    %c0_16 = arith.constant 0 : index
    %39 = vector.load %arg7[%c0_14, %c0_15, %c0_16] : memref<1x8x32xf32, #tpu.memory_space<vmem>>, vector<1x8x32xf32>
    %40 = vector.shape_cast %39 : vector<1x8x32xf32> to vector<8x32xf32>
    %41 = vector.shape_cast %38 : vector<8x32xf32> to vector<1x8x32xf32>
    tpu.vector_store %arg7[%c0_14, %c0_15, %c0_16], %41 {strides = array<i32>} : memref<1x8x32xf32, #tpu.memory_space<vmem>>, vector<1x8x32xf32>,
    %cst_17 = arith.constant dense<0.000000e+00> : vector<8x8xf32>
    %42 = vector.multi_reduction <add>, %24, %cst_17 [0] : vector<4x8x8xf32> to vector<8x8xf32>
    %c0_18 = arith.constant 0 : index
    %c0_19 = arith.constant 0 : index
    %c0_20 = arith.constant 0 : index
    %43 = vector.load %arg8[%c0_18, %c0_19, %c0_20] : memref<1x8x8xf32, #tpu.memory_space<vmem>>, vector<1x8x8xf32>
    %44 = vector.shape_cast %43 : vector<1x8x8xf32> to vector<8x8xf32>
    %45 = vector.shape_cast %42 : vector<8x8xf32> to vector<1x8x8xf32>
    tpu.vector_store %arg8[%c0_18, %c0_19, %c0_20], %45 {strides = array<i32>} : memref<1x8x8xf32, #tpu.memory_space<vmem>>, vector<1x8x8xf32>,
    %46 = arith.extui %26 : vector<4x8x8xi1> to vector<4x8x8xi32>
    %47 = arith.sitofp %46 : vector<4x8x8xi32> to vector<4x8x8xf32>
    %cst_21 = arith.constant dense<0.000000e+00> : vector<8x8xf32>
    %48 = vector.multi_reduction <add>, %47, %cst_21 [0] : vector<4x8x8xf32> to vector<8x8xf32>
    %c0_22 = arith.constant 0 : index
    %c0_23 = arith.constant 0 : index
    %c0_24 = arith.constant 0 : index
    %49 = vector.load %arg9[%c0_22, %c0_23, %c0_24] : memref<1x8x8xf32, #tpu.memory_space<vmem>>, vector<1x8x8xf32>
    %50 = vector.shape_cast %49 : vector<1x8x8xf32> to vector<8x8xf32>
    %51 = vector.shape_cast %48 : vector<8x8xf32> to vector<1x8x8xf32>
    tpu.vector_store %arg9[%c0_22, %c0_23, %c0_24], %51 {strides = array<i32>} : memref<1x8x8xf32, #tpu.memory_space<vmem>>, vector<1x8x8xf32>,
    return
  }
  func.func @transform_0(%arg0: i32, %arg1: i32) -> (i32, i32, i32) {
    %c0_i32 = arith.constant 0 : i32
    %c0_i32_0 = arith.constant 0 : i32
    %c0_i32_1 = arith.constant 0 : i32
    return %arg0, %c0_i32, %c0_i32_0 : i32, i32, i32
  }
  func.func @transform_1(%arg0: i32, %arg1: i32) -> (i32, i32) {
    %c0_i32 = arith.constant 0 : i32
    %c0_i32_0 = arith.constant 0 : i32
    %c0_i32_1 = arith.constant 0 : i32
    return %c0_i32, %c0_i32_0 : i32, i32
  }
  func.func @transform_2(%arg0: i32, %arg1: i32) -> (i32, i32) {
    %c0_i32 = arith.constant 0 : i32
    %c0_i32_0 = arith.constant 0 : i32
    %c0_i32_1 = arith.constant 0 : i32
    return %c0_i32, %c0_i32_0 : i32, i32
  }
  func.func @transform_3(%arg0: i32, %arg1: i32) -> (i32, i32) {
    %c0_i32 = arith.constant 0 : i32
    %c0_i32_0 = arith.constant 0 : i32
    %c0_i32_1 = arith.constant 0 : i32
    return %c0_i32, %c0_i32_0 : i32, i32
  }
  func.func @transform_4(%arg0: i32, %arg1: i32) -> (i32, i32) {
    %c0_i32 = arith.constant 0 : i32
    %c0_i32_0 = arith.constant 0 : i32
    %c0_i32_1 = arith.constant 0 : i32
    return %c0_i32, %c0_i32_0 : i32, i32
  }
  func.func @transform_5(%arg0: i32, %arg1: i32) -> (i32, i32, i32) {
    %c0_i32 = arith.constant 0 : i32
    %c0_i32_0 = arith.constant 0 : i32
    return %arg0, %arg1, %c0_i32 : i32, i32, i32
  }
  func.func @transform_6(%arg0: i32, %arg1: i32) -> (i32, i32, i32) {
    %c0_i32 = arith.constant 0 : i32
    %c0_i32_0 = arith.constant 0 : i32
    return %arg0, %arg1, %c0_i32 : i32, i32, i32
  }
  func.func @transform_7(%arg0: i32, %arg1: i32) -> (i32, i32, i32) {
    %c0_i32 = arith.constant 0 : i32
    %c0_i32_0 = arith.constant 0 : i32
    return %arg0, %arg1, %c0_i32 : i32, i32, i32
  }
}

</mosaic_0001>

<llo_original>
// kernel: tpu_custom_call.1
$region0: #{tpu_custom_call.1}
  #allocation0 [shape = 'u32[]', space=smem, size = 0x4, offset = 0x4, fixed_abs, tag = 'smem constant byte address 0x4 - core index']
  #allocation1 [shape = 'u32[144,128]{1,0:T(1,128)}', space=vmem, size = 0x12000, scoped, tag = 'internal scratch']
  #allocation2 [shape = 'f32[8,96]{1,0:T(8,128)}', space=vmem, size = 0x1000, scoped, tag = 'scratch operand']
  %s0 = inlined_call_operand.hbm [shape: f32[2,8,32], index: 0, kind: input, shape index: {}]
  %s1 = inlined_call_operand.hbm [shape: f32[32,96], index: 1, kind: input, shape index: {}]
  %s2 = inlined_call_operand.vmem [shape: f32[1,96], index: 2, kind: input, shape index: {}]
  %s3 = inlined_call_operand.hbm [shape: f32[32,32], index: 3, kind: input, shape index: {}]
  %s4 = inlined_call_operand.vmem [shape: f32[1,32], index: 4, kind: input, shape index: {}]
  %s5 = inlined_call_operand.hbm [shape: f32[2,8,32], index: 5, kind: output, shape index: {0}]
  %s6 = inlined_call_operand.hbm [shape: f32[2,8,8], index: 6, kind: output, shape index: {1}]
  %s7 = inlined_call_operand.hbm [shape: f32[2,8,8], index: 7, kind: output, shape index: {2}]
  %8 = xla_tuple %s5, %s6, %s7
  %s9 = sld [smem:[#allocation0]]
  $region85: #{tpu_custom_call.1} parent=0
    _
  %s11 = ssub.s32 1, %s9
  %s12 = scalar_select 0, %s11, %s9
  $region1: #{tpu_custom_call.1} parent=0
    #allocation3 [shape = 'u8[8192]{0}', space=vmem, size = 0x2000, scoped, tag = 'input window, operand 0']
    #allocation4 [shape = 's32[2]{0}', space=sflag, size = 0x8, scoped, tag = 'scoped memory for tpu_custom_call.1']
    #allocation5 [shape = 's32[2]{0}', space=sflag, size = 0x8, scoped, tag = 'scoped memory for tpu_custom_call.1']
    #allocation6 [shape = 'u8[16384]{0}', space=vmem, size = 0x4000, scoped, tag = 'input window, operand 1, single buffered']
    #allocation7 [shape = 's32[1]{0}', space=sflag, size = 0x4, scoped, tag = 'scoped memory for tpu_custom_call.1']
    #allocation8 [shape = 'u8[16384]{0}', space=vmem, size = 0x4000, scoped, tag = 'input window, operand 3, single buffered']
    #allocation9 [shape = 'u8[8192]{0}', space=vmem, size = 0x2000, scoped, tag = 'output window, operand 0']
    #allocation10 [shape = 'u8[8192]{0}', space=vmem, size = 0x2000, scoped, tag = 'output window, operand 1']
    #allocation11 [shape = 's32[2]{0}', space=sflag, size = 0x8, scoped, tag = 'scoped memory for tpu_custom_call.1']
    #allocation12 [shape = 'u8[8192]{0}', space=vmem, size = 0x2000, scoped, tag = 'output window, operand 2']
    %13 = vsyncpa [#allocation4], 0
    %s14 = scalar_lea.sflag [#allocation4], 1
    %15 = vsyncpa %s14, 0
    %16 = vsyncpa [#allocation7], 0
    %17 = vsyncpa [#allocation5], 0
    %s18 = scalar_lea.sflag [#allocation5], 1
    %19 = vsyncpa %s18, 0
    %20 = vsyncpa [#allocation11], 0
    %s21 = scalar_lea.sflag [#allocation11], 1
    %22 = vsyncpa %s21, 0
    loop: start=0, step=1, limit=4
    $region2: #{tpu_custom_call.1} parent=1 // loop_pre_header
      _
    $region3: #{tpu_custom_call.1} parent=1 // loop_header
      %s24 = sphi 0, %s28
      %p25 = scmp.ge.s32.totalorder %s24, 4
      %s31 = sphi 0, %s43
      %s32 = sphi 0, %s39
      %s33 = sphi 0, %s31
      %s34 = sphi 0, %s32
      %s35 = sphi 0, %s33
      %s36 = sphi 0, %s34
      %s46 = sphi 0, %s48
      %s49 = sphi 0, %s46
      %s50 = sphi 0, %s49
      %s66 = sphi 0, %s50
      %s70 = sphi 0, %s70
      %s72 = sphi 0, %s70
      %s73 = sphi 0, %s72
      %s87 = sphi 0, %s73
      %s91 = sphi 0, %s91
      %s93 = sphi 0, %s91
      %s94 = sphi 0, %s93
      %s108 = sphi 0, %s94
      %s112 = sphi 0, %s112
      %s114 = sphi 0, %s112
      %s115 = sphi 0, %s114
      %s129 = sphi 0, %s115
      %s133 = sphi 0, %s133
      %s135 = sphi 0, %s133
      %s136 = sphi 0, %s135
      %s150 = sphi 0, %s136
      %s158 = sphi 0, %s160
      %s161 = sphi 0, %s158
      %s162 = sphi 0, %s161
      %s178 = sphi 0, %s162
      %s186 = sphi 0, %s188
      %s189 = sphi 0, %s186
      %s190 = sphi 0, %s189
      %s206 = sphi 0, %s190
      %s214 = sphi 0, %s216
      %s217 = sphi 0, %s214
      %s218 = sphi 0, %s217
      %s234 = sphi 0, %s218
    $region4: #{tpu_custom_call.1} parent=1 // loop_header_branch
      %27 = sbr.rel (%p25) target = $region8
    $region5: #{tpu_custom_call.1} parent=1 // loop_body
      %s29 = ssub.s32 %s24, 1
      %s30 = ssub.s32 %s24, 2
      %s37 = sadd.s32 1, %s32
      %p38 = scmp.ge.s32.totalorder %s37, 1
      %s39 = scalar_select %p38, 0, %s37
      %s40 = sadd.s32 1, %s31
      %s41 = scalar_select %p38, %s40, %s31
      %p42 = scmp.ge.s32.totalorder %s41, 2
      %s43 = scalar_select %p42, 0, %s41
      %s44 = ssub.s32 %s31, %s43
      %p45 = scmp.eq.s32.totalorder %s44, 0
      %s47 = sadd.s32 %s46, 1
      %s48 = scalar_select %p45, %s46, %s47
      %p51 = pneg %p45
      %p52 = scmp.eq.s32.totalorder %s24, 1
      %p53 = por %p51, %p52
      %p54 = scmp.ne.s32.totalorder %s46, %s49
      %p55 = scmp.eq.s32.totalorder %s24, 0
      %p56 = por %p54, %p55
      %p57 = scmp.ne.s32.totalorder %s46, %s49
      %p58 = scmp.eq.s32.totalorder %s29, 1
      %p59 = por %p57, %p58
      %p60 = scmp.ne.s32.totalorder %s49, %s50
      %p61 = scmp.eq.s32.totalorder %s29, 0
      %p62 = por %p60, %p61
      %p63 = scmp.ne.s32.totalorder %s49, %s50
      %p64 = scmp.eq.s32.totalorder %s30, 1
      %p65 = por %p63, %p64
      %p67 = scmp.ne.s32.totalorder %s50, %s66
      %p68 = scmp.eq.s32.totalorder %s30, 0
      %p69 = por %p67, %p68
      %s71 = sadd.s32 %s70, 1
      %p74 = scmp.eq.s32.totalorder %s24, 1
      %p75 = scmp.ne.s32.totalorder %s70, %s72
      %p76 = scmp.eq.s32.totalorder %s24, 0
      %p77 = por %p75, %p76
      %p78 = scmp.ne.s32.totalorder %s70, %s72
      %p79 = scmp.eq.s32.totalorder %s29, 1
      %p80 = por %p78, %p79
      %p81 = scmp.ne.s32.totalorder %s72, %s73
      %p82 = scmp.eq.s32.totalorder %s29, 0
      %p83 = por %p81, %p82
      %p84 = scmp.ne.s32.totalorder %s72, %s73
      %p85 = scmp.eq.s32.totalorder %s30, 1
      %p86 = por %p84, %p85
      %p88 = scmp.ne.s32.totalorder %s73, %s87
      %p89 = scmp.eq.s32.totalorder %s30, 0
      %p90 = por %p88, %p89
      %s92 = sadd.s32 %s91, 1
      %p95 = scmp.eq.s32.totalorder %s24, 1
      %p96 = scmp.ne.s32.totalorder %s91, %s93
      %p97 = scmp.eq.s32.totalorder %s24, 0
      %p98 = por %p96, %p97
      %p99 = scmp.ne.s32.totalorder %s91, %s93
      %p100 = scmp.eq.s32.totalorder %s29, 1
      %p101 = por %p99, %p100
      %p102 = scmp.ne.s32.totalorder %s93, %s94
      %p103 = scmp.eq.s32.totalorder %s29, 0
      %p104 = por %p102, %p103
      %p105 = scmp.ne.s32.totalorder %s93, %s94
      %p106 = scmp.eq.s32.totalorder %s30, 1
      %p107 = por %p105, %p106
      %p109 = scmp.ne.s32.totalorder %s94, %s108
      %p110 = scmp.eq.s32.totalorder %s30, 0
      %p111 = por %p109, %p110
      %s113 = sadd.s32 %s112, 1
      %p116 = scmp.eq.s32.totalorder %s24, 1
      %p117 = scmp.ne.s32.totalorder %s112, %s114
      %p118 = scmp.eq.s32.totalorder %s24, 0
      %p119 = por %p117, %p118
      %p120 = scmp.ne.s32.totalorder %s112, %s114
      %p121 = scmp.eq.s32.totalorder %s29, 1
      %p122 = por %p120, %p121
      %p123 = scmp.ne.s32.totalorder %s114, %s115
      %p124 = scmp.eq.s32.totalorder %s29, 0
      %p125 = por %p123, %p124
      %p126 = scmp.ne.s32.totalorder %s114, %s115
      %p127 = scmp.eq.s32.totalorder %s30, 1
      %p128 = por %p126, %p127
      %p130 = scmp.ne.s32.totalorder %s115, %s129
      %p131 = scmp.eq.s32.totalorder %s30, 0
      %p132 = por %p130, %p131
      %s134 = sadd.s32 %s133, 1
      %p137 = scmp.eq.s32.totalorder %s24, 1
      %p138 = scmp.ne.s32.totalorder %s133, %s135
      %p139 = scmp.eq.s32.totalorder %s24, 0
      %p140 = por %p138, %p139
      %p141 = scmp.ne.s32.totalorder %s133, %s135
      %p142 = scmp.eq.s32.totalorder %s29, 1
      %p143 = por %p141, %p142
      %p144 = scmp.ne.s32.totalorder %s135, %s136
      %p145 = scmp.eq.s32.totalorder %s29, 0
      %p146 = por %p144, %p145
      %p147 = scmp.ne.s32.totalorder %s135, %s136
      %p148 = scmp.eq.s32.totalorder %s30, 1
      %p149 = por %p147, %p148
      %p151 = scmp.ne.s32.totalorder %s136, %s150
      %p152 = scmp.eq.s32.totalorder %s30, 0
      %p153 = por %p151, %p152
      %s154 = ssub.s32 %s31, %s43
      %s155 = ssub.s32 %s32, %s39
      %s156 = sor.u32 %s154, %s155
      %p157 = scmp.eq.s32.totalorder %s156, 0
      %s159 = sadd.s32 %s158, 1
      %s160 = scalar_select %p157, %s158, %s159
      %p163 = pneg %p157
      %p164 = scmp.eq.s32.totalorder %s24, 1
      %p165 = por %p163, %p164
      %p166 = scmp.ne.s32.totalorder %s158, %s161
      %p167 = scmp.eq.s32.totalorder %s24, 0
      %p168 = por %p166, %p167
      %p169 = scmp.ne.s32.totalorder %s158, %s161
      %p170 = scmp.eq.s32.totalorder %s29, 1
      %p171 = por %p169, %p170
      %p172 = scmp.ne.s32.totalorder %s161, %s162
      %p173 = scmp.eq.s32.totalorder %s29, 0
      %p174 = por %p172, %p173
      %p175 = scmp.ne.s32.totalorder %s161, %s162
      %p176 = scmp.eq.s32.totalorder %s30, 1
      %p177 = por %p175, %p176
      %p179 = scmp.ne.s32.totalorder %s162, %s178
      %p180 = scmp.eq.s32.totalorder %s30, 0
      %p181 = por %p179, %p180
      %s182 = ssub.s32 %s31, %s43
      %s183 = ssub.s32 %s32, %s39
      %s184 = sor.u32 %s182, %s183
      %p185 = scmp.eq.s32.totalorder %s184, 0
      %s187 = sadd.s32 %s186, 1
      %s188 = scalar_select %p185, %s186, %s187
      %p191 = pneg %p185
      %p192 = scmp.eq.s32.totalorder %s24, 1
      %p193 = por %p191, %p192
      %p194 = scmp.ne.s32.totalorder %s186, %s189
      %p195 = scmp.eq.s32.totalorder %s24, 0
      %p196 = por %p194, %p195
      %p197 = scmp.ne.s32.totalorder %s186, %s189
      %p198 = scmp.eq.s32.totalorder %s29, 1
      %p199 = por %p197, %p198
      %p200 = scmp.ne.s32.totalorder %s189, %s190
      %p201 = scmp.eq.s32.totalorder %s29, 0
      %p202 = por %p200, %p201
      %p203 = scmp.ne.s32.totalorder %s189, %s190
      %p204 = scmp.eq.s32.totalorder %s30, 1
      %p205 = por %p203, %p204
      %p207 = scmp.ne.s32.totalorder %s190, %s206
      %p208 = scmp.eq.s32.totalorder %s30, 0
      %p209 = por %p207, %p208
      %s210 = ssub.s32 %s31, %s43
      %s211 = ssub.s32 %s32, %s39
      %s212 = sor.u32 %s210, %s211
      %p213 = scmp.eq.s32.totalorder %s212, 0
      %s215 = sadd.s32 %s214, 1
      %s216 = scalar_select %p213, %s214, %s215
      %p219 = pneg %p213
      %p220 = scmp.eq.s32.totalorder %s24, 1
      %p221 = por %p219, %p220
      %p222 = scmp.ne.s32.totalorder %s214, %s217
      %p223 = scmp.eq.s32.totalorder %s24, 0
      %p224 = por %p222, %p223
      %p225 = scmp.ne.s32.totalorder %s214, %s217
      %p226 = scmp.eq.s32.totalorder %s29, 1
      %p227 = por %p225, %p226
      %p228 = scmp.ne.s32.totalorder %s217, %s218
      %p229 = scmp.eq.s32.totalorder %s29, 0
      %p230 = por %p228, %p229
      %p231 = scmp.ne.s32.totalorder %s217, %s218
      %p232 = scmp.eq.s32.totalorder %s30, 1
      %p233 = por %p231, %p232
      %p235 = scmp.ne.s32.totalorder %s218, %s234
      %p236 = scmp.eq.s32.totalorder %s30, 0
      %p237 = por %p235, %p236
      %p238 = scmp.le.s32.totalorder 1, %s24
      %p239 = scmp.lt.s32.totalorder %s24, 3
      %p240 = pnand %p238, %p239
      %p241 = pneg %p240
      // Predicated region
      $region9: #{tpu_custom_call.1} parent=5 // pred_check
        _
      $region10: #{tpu_custom_call.1} parent=5 // pred_check_branch
        %243 = sbr.rel (%p240) target = $region12
      $region11: #{tpu_custom_call.1} parent=5 // pred_region
        %s244 = ssub.s32 %s24, 1
        // Predicated region
        $region13: #{tpu_custom_call.1} parent=11 // pred_check
          %p245 = pneg %p83
        $region14: #{tpu_custom_call.1} parent=11 // pred_check_branch
          %247 = sbr.rel (%p245) target = $region16
        $region15: #{tpu_custom_call.1} parent=11 // pred_region
          %s249 = ssub.s32 512, 512
          %250 = vsyncadd [#allocation7], %s249
          %s251 = sshll.u32 [#allocation6], 4
          %s252 = int_to_ptr.vmem [resolvable:$true] %s251
          %257 = dma.hbm_to_vmem [thread:$0]  %s1, 512, %s252, [#allocation7], 128, 128, 8
        $region16: #{tpu_custom_call.1} parent=11 // pred_fallthru
          _
        // Predicated region
        $region17: #{tpu_custom_call.1} parent=11 // pred_check
          %p258 = pneg %p104
        $region18: #{tpu_custom_call.1} parent=11 // pred_check_branch
          %260 = sbr.rel (%p258) target = $region20
        $region19: #{tpu_custom_call.1} parent=11 // pred_region
          _
        $region20: #{tpu_custom_call.1} parent=11 // pred_fallthru
          _
        // Predicated region
        $region21: #{tpu_custom_call.1} parent=11 // pred_check
          %p261 = pneg %p125
        $region22: #{tpu_custom_call.1} parent=11 // pred_check_branch
          %263 = sbr.rel (%p261) target = $region24
        $region23: #{tpu_custom_call.1} parent=11 // pred_region
          %s265 = ssub.s32 512, 512
          %266 = vsyncadd [#allocation7], %s265
          %s267 = sshll.u32 [#allocation8], 4
          %s268 = int_to_ptr.vmem [resolvable:$true] %s267
          %273 = dma.hbm_to_vmem [thread:$0]  %s3, 512, %s268, [#allocation7], 128, 128, 8
        $region24: #{tpu_custom_call.1} parent=11 // pred_fallthru
          _
        // Predicated region
        $region25: #{tpu_custom_call.1} parent=11 // pred_check
          %p274 = pneg %p146
        $region26: #{tpu_custom_call.1} parent=11 // pred_check_branch
          %276 = sbr.rel (%p274) target = $region28
        $region27: #{tpu_custom_call.1} parent=11 // pred_region
          _
        $region28: #{tpu_custom_call.1} parent=11 // pred_fallthru
          _
      $region12: #{tpu_custom_call.1} parent=5 // pred_fallthru
        _
      %p277 = scmp.lt.s32.totalorder %s24, 2
      // Predicated region
      $region29: #{tpu_custom_call.1} parent=5 // pred_check
        %p278 = pneg %p277
      $region30: #{tpu_custom_call.1} parent=5 // pred_check_branch
        %280 = sbr.rel (%p278) target = $region32
      $region31: #{tpu_custom_call.1} parent=5 // pred_region
        // Predicated region
        $region33: #{tpu_custom_call.1} parent=31 // pred_check
          %p281 = pneg %p56
        $region34: #{tpu_custom_call.1} parent=31 // pred_check_branch
          %283 = sbr.rel (%p281) target = $region36
        $region35: #{tpu_custom_call.1} parent=31 // pred_region
          %s284 = sand.u32 %s46, 1
          %s285 = scalar_lea.sflag [#allocation4], %s284
          %s286 = sand.u32 %s46, 1
          %s287 = smul.addr %s286, 8
          %s288 = scalar_lea.vmem [#allocation3], %s287
          %s290 = ssub.s32 128, 128
          %291 = vsyncadd %s285, %s290
          %s292 = smul.addr %s31, 128
          %s293 = scalar_lea.hbm %s0, %s292
          %s295 = sshll.u32 %s288, 4
          %s296 = int_to_ptr.vmem [resolvable:$true] %s295
          %298 = dma.hbm_to_vmem [thread:$0]  %s293, 128, %s296, %s285
        $region36: #{tpu_custom_call.1} parent=31 // pred_fallthru
          _
      $region32: #{tpu_custom_call.1} parent=5 // pred_fallthru
        _
      %p299 = scmp.le.s32.totalorder 1, %s24
      %p300 = scmp.lt.s32.totalorder %s24, 3
      %p301 = pnand %p299, %p300
      %p302 = pneg %p301
      // Predicated region
      $region37: #{tpu_custom_call.1} parent=5 // pred_check
        _
      $region38: #{tpu_custom_call.1} parent=5 // pred_check_branch
        %304 = sbr.rel (%p301) target = $region40
      $region39: #{tpu_custom_call.1} parent=5 // pred_region
        %s305 = ssub.s32 %s24, 1
        %s306 = sand.u32 %s49, 1
        %s307 = scalar_lea.sflag [#allocation4], %s306
        %s308 = sand.u32 %s49, 1
        %s309 = smul.addr %s308, 8
        %s310 = scalar_lea.vmem [#allocation3], %s309
        // Predicated region
        $region41: #{tpu_custom_call.1} parent=39 // pred_check
          %p311 = pneg %p62
        $region42: #{tpu_custom_call.1} parent=39 // pred_check_branch
          %313 = sbr.rel (%p311) target = $region44
        $region43: #{tpu_custom_call.1} parent=39 // pred_region
          %314 = dma.done %s307, 128
        $region44: #{tpu_custom_call.1} parent=39 // pred_fallthru
          _
        // Predicated region
        $region45: #{tpu_custom_call.1} parent=39 // pred_check
          %p315 = pneg %p83
        $region46: #{tpu_custom_call.1} parent=39 // pred_check_branch
          %317 = sbr.rel (%p315) target = $region48
        $region47: #{tpu_custom_call.1} parent=39 // pred_region
          %318 = dma.done [#allocation7], 512
        $region48: #{tpu_custom_call.1} parent=39 // pred_fallthru
          _
        // Predicated region
        $region49: #{tpu_custom_call.1} parent=39 // pred_check
          %p319 = pneg %p125
        $region50: #{tpu_custom_call.1} parent=39 // pred_check_branch
          %321 = sbr.rel (%p319) target = $region52
        $region51: #{tpu_custom_call.1} parent=39 // pred_region
          %322 = dma.done [#allocation7], 512
        $region52: #{tpu_custom_call.1} parent=39 // pred_fallthru
          _
        %s323 = sand.u32 %s49, 1
        %s324 = scalar_lea.sflag [#allocation4], %s323
        %s325 = sand.u32 %s49, 1
        %s326 = smul.addr %s325, 8
        %s327 = scalar_lea.vmem [#allocation3], %s326
        %p328 = pneg %p62
        %p329 = pneg %p59
        %p330 = pneg %p83
        %p331 = pneg %p80
        %p332 = pneg %p104
        %p333 = pneg %p101
        %p334 = pneg %p125
        %p335 = pneg %p122
        %p336 = pneg %p146
        %p337 = pneg %p143
        %p338 = pneg %p174
        %p339 = pneg %p171
        %s340 = sand.u32 %s161, 1
        %s341 = scalar_lea.sflag [#allocation5], %s340
        %s342 = sand.u32 %s161, 1
        %s343 = smul.addr %s342, 8
        %s344 = scalar_lea.vmem [#allocation9], %s343
        %p345 = pneg %p202
        %p346 = pneg %p199
        %s347 = sand.u32 %s29, 1
        %s348 = scalar_lea.sflag [#allocation11], %s347
        %s349 = sand.u32 %s189, 1
        %s350 = smul.addr %s349, 8
        %s351 = scalar_lea.vmem [#allocation10], %s350
        %p352 = pneg %p230
        %p353 = pneg %p227
        %s354 = sand.u32 %s29, 1
        %s355 = scalar_lea.sflag [#allocation11], %s354
        %s356 = sand.u32 %s217, 1
        %s357 = smul.addr %s356, 8
        %s358 = scalar_lea.vmem [#allocation12], %s357
        %p359 = scmp.eq.s32.totalorder %s34, 0
        // Predicated region
        $region53: #{tpu_custom_call.1} parent=39 // pred_check
          %p360 = pneg %p359
        $region54: #{tpu_custom_call.1} parent=39 // pred_check_branch
          %362 = sbr.rel (%p360) target = $region56
        $region55: #{tpu_custom_call.1} parent=39 // pred_region
          %v363 = vld [vmem:[%s310] sm:$0xff]
          %v364 = vld [vmem:[#allocation6] sm:$0xff]
          %v365 = vld [vmem:[#allocation6 + $0x8] sm:$0xff]
          %v366 = vld [vmem:[#allocation6 + $0x10] sm:$0xff]
          %v367 = vld [vmem:[#allocation6 + $0x18] sm:$0xff]
          %v368 = vld [vmem:[%s2] sm:$0x1]
          %v370 = vlaneseq
          %v371 = vshrl.u32 %v370, 7
          %v372 = vsub.s32 0, %v371
          %v373 = vrot.slane %v368, %v372
          %vm375 = vcmask 261120
          %v377 = vsel %vm375, %v363, 0
          %379 = vmatprep.subr.mxu0 0.0
          %380 = vmatpush1.msra.mxu0 %v364
          %381 = vmatprep.subr.mxu0 0.0
          %382 = vmatpush1.msra.mxu0 %v365
          %383 = vmatprep.subr.mxu0 0.0
          %384 = vmatpush1.msra.mxu0 %v366
          %385 = vmatprep.subr.mxu0 0.0
          %386 = vmatpush1.msra.mxu0 %v367
          %387 = vmatprep.subr.mxu0 0.0
          %388 = vmatpush1.msra.mxu0 0.0
          %389 = vmatprep.subr.mxu0 0.0
          %390 = vmatpush1.msra.mxu0 0.0
          %391 = vmatprep.subr.mxu0 0.0
          %392 = vmatpush1.msra.mxu0 0.0
          %393 = vmatprep.subr.mxu0 0.0
          %394 = vmatpush1.msra.mxu0 0.0
          %395 = vmatprep.subr.mxu0 0.0
          %396 = vmatpush1.msra.mxu0 0.0
          %397 = vmatprep.subr.mxu0 0.0
          %398 = vmatpush1.msra.mxu0 0.0
          %399 = vmatprep.subr.mxu0 0.0
          %400 = vmatpush1.msra.mxu0 0.0
          %401 = vmatprep.subr.mxu0 0.0
          %402 = vmatpush1.msra.mxu0 0.0
          %403 = vmatprep.subr.mxu0 0.0
          %404 = vmatpush1.msra.mxu0 0.0
          %405 = vmatprep.subr.mxu0 0.0
          %406 = vmatpush1.msra.mxu0 0.0
          %407 = vmatprep.subr.mxu0 0.0
          %408 = vmatpush1.msra.mxu0 0.0
          %409 = vmatprep.subr.mxu0 0.0
          %410 = vmatpush1.msra.mxu0 0.0
          %411 = vmatprep.subr.mxu0 0.0
          %412 = vmatpush1.msra.mxu0 0.0
          %413 = vmatprep.subr.mxu0 0.0
          %414 = vmatpush1.msra.mxu0 0.0
          %415 = vmatprep.subr.mxu0 0.0
          %416 = vmatpush1.msra.mxu0 0.0
          %417 = vmatprep.subr.mxu0 0.0
          %418 = vmatpush1.msra.mxu0 0.0
          %419 = vmatprep.subr.mxu0 0.0
          %420 = vmatpush1.msra.mxu0 0.0
          %421 = vmatprep.subr.mxu0 0.0
          %422 = vmatpush1.msra.mxu0 0.0
          %423 = vmatprep.subr.mxu0 0.0
          %424 = vmatpush1.msra.mxu0 0.0
          %425 = vmatprep.subr.mxu0 0.0
          %426 = vmatpush1.msra.mxu0 0.0
          %427 = vmatprep.subr.mxu0 0.0
          %428 = vmatpush1.msra.mxu0 0.0
          %429 = vmatprep.subr.mxu0 0.0
          %430 = vmatpush1.msra.mxu0 0.0
          %431 = vmatprep.subr.mxu0 0.0
          %432 = vmatpush1.msra.mxu0 0.0
          %433 = vmatprep.subr.mxu0 0.0
          %434 = vmatpush1.msra.mxu0 0.0
          %435 = vmatprep.subr.mxu0 0.0
          %436 = vmatpush1.msra.mxu0 0.0
          %437 = vmatprep.subr.mxu0 0.0
          %438 = vmatpush1.msra.mxu0 0.0
          %439 = vmatprep.subr.mxu0 0.0
          %440 = vmatpush1.msra.mxu0 0.0
          %441 = vmatprep.subr.mxu0 0.0
          %442 = vmatpush1.msra.mxu0 0.0
          %443 = vmatprep.mubr.f32.mxu0 0.0
          %444 = vmatmul.mubr.f32.gmra.mrb[0].mxu0 %v377
          %v445 = vpop.f32.mrb[0].mxu0
          %v446 = vadd.f32 %v373, %v445
          %v447 = vpop.f32.mrb[0].mxu0
          %448 = vdwg.mxu0
          %vm449 = vcmask 785408
          %450 = vst.msk [vmem:[#allocation2] sm:$0xff] %vm449, %v446
        $region56: #{tpu_custom_call.1} parent=39 // pred_fallthru
          _
        %s451 = smul.u32 %s34, 8
        %s452 = scalar_lea.vmem [#allocation2], %s451
        %v453 = vld [vmem:[%s452] sm:$0xff]
        %v454 = vld [vmem:[#allocation2] sm:$0xff]
        %456 = vrot.lane.b32.xlu0 %v453, 120
        %v457 = vpop.permute.xlu0 %456
        %458 = vrot.lane.b32.xlu0 %v453, 112
        %v459 = vpop.permute.xlu0 %458
        %460 = vrot.lane.b32.xlu0 %v453, 104
        %v461 = vpop.permute.xlu0 %460
        %463 = vrot.lane.b32.xlu0 %v454, 120
        %v464 = vpop.permute.xlu0 %463
        %465 = vrot.lane.b32.xlu0 %v454, 112
        %v466 = vpop.permute.xlu0 %465
        %467 = vrot.lane.b32.xlu0 %v454, 104
        %v468 = vpop.permute.xlu0 %467
        %469 = vrot.lane.b32.xlu0 %v454, 96
        %v470 = vpop.permute.xlu0 %469
        %471 = vrot.lane.b32.xlu0 %v464, 96
        %v472 = vpop.permute.xlu0 %471
        %473 = vrot.lane.b32.xlu0 %v466, 96
        %v474 = vpop.permute.xlu0 %473
        %475 = vrot.lane.b32.xlu0 %v468, 96
        %v476 = vpop.permute.xlu0 %475
        %481 = vxpose.xlu0.b32.start [1/16] %v470, 128
        %482 = vxpose.xlu0.b32.cont [2/16] 0.0, 128
        %483 = vxpose.xlu0.b32.cont [3/16] 0.0, 128
        %484 = vxpose.xlu0.b32.cont [4/16] 0.0, 128
        %485 = vxpose.xlu0.b32.cont [5/16] 0.0, 128
        %486 = vxpose.xlu0.b32.cont [6/16] 0.0, 128
        %487 = vxpose.xlu0.b32.cont [7/16] 0.0, 128
        %488 = vxpose.xlu0.b32.cont [8/16] 0.0, 128
        %489 = vxpose.xlu0.b32.cont [9/16] 0.0, 128
        %490 = vxpose.xlu0.b32.cont [10/16] 0.0, 128
        %491 = vxpose.xlu0.b32.cont [11/16] 0.0, 128
        %492 = vxpose.xlu0.b32.cont [12/16] 0.0, 128
        %493 = vxpose.xlu0.b32.cont [13/16] 0.0, 128
        %494 = vxpose.xlu0.b32.cont [14/16] 0.0, 128
        %495 = vxpose.xlu0.b32.cont [15/16] 0.0, 128
        %496 = vxpose.xlu0.b32.end [16/16] 0.0, 128
        %v497 = vpop.trf.xlu0
        %v498 = vpop.trf.xlu0
        %v499 = vpop.trf.xlu0
        %v500 = vpop.trf.xlu0
        %v501 = vpop.trf.xlu0
        %v502 = vpop.trf.xlu0
        %v503 = vpop.trf.xlu0
        %v504 = vpop.trf.xlu0
        %v505 = vpop.trf.xlu0
        %v506 = vpop.trf.xlu0
        %v507 = vpop.trf.xlu0
        %v508 = vpop.trf.xlu0
        %v509 = vpop.trf.xlu0
        %v510 = vpop.trf.xlu0
        %v511 = vpop.trf.xlu0
        %v512 = vpop.trf.xlu0
        %513 = vxpose.xlu0.b32.start [1/16] %v472, 128
        %514 = vxpose.xlu0.b32.cont [2/16] 0.0, 128
        %515 = vxpose.xlu0.b32.cont [3/16] 0.0, 128
        %516 = vxpose.xlu0.b32.cont [4/16] 0.0, 128
        %517 = vxpose.xlu0.b32.cont [5/16] 0.0, 128
        %518 = vxpose.xlu0.b32.cont [6/16] 0.0, 128
        %519 = vxpose.xlu0.b32.cont [7/16] 0.0, 128
        %520 = vxpose.xlu0.b32.cont [8/16] 0.0, 128
        %521 = vxpose.xlu0.b32.cont [9/16] 0.0, 128
        %522 = vxpose.xlu0.b32.cont [10/16] 0.0, 128
        %523 = vxpose.xlu0.b32.cont [11/16] 0.0, 128
        %524 = vxpose.xlu0.b32.cont [12/16] 0.0, 128
        %525 = vxpose.xlu0.b32.cont [13/16] 0.0, 128
        %526 = vxpose.xlu0.b32.cont [14/16] 0.0, 128
        %527 = vxpose.xlu0.b32.cont [15/16] 0.0, 128
        %528 = vxpose.xlu0.b32.end [16/16] 0.0, 128
        %v529 = vpop.trf.xlu0
        %v530 = vpop.trf.xlu0
        %v531 = vpop.trf.xlu0
        %v532 = vpop.trf.xlu0
        %v533 = vpop.trf.xlu0
        %v534 = vpop.trf.xlu0
        %v535 = vpop.trf.xlu0
        %v536 = vpop.trf.xlu0
        %v537 = vpop.trf.xlu0
        %v538 = vpop.trf.xlu0
        %v539 = vpop.trf.xlu0
        %v540 = vpop.trf.xlu0
        %v541 = vpop.trf.xlu0
        %v542 = vpop.trf.xlu0
        %v543 = vpop.trf.xlu0
        %v544 = vpop.trf.xlu0
        %545 = vxpose.xlu0.b32.start [1/16] %v474, 128
        %546 = vxpose.xlu0.b32.cont [2/16] 0.0, 128
        %547 = vxpose.xlu0.b32.cont [3/16] 0.0, 128
        %548 = vxpose.xlu0.b32.cont [4/16] 0.0, 128
        %549 = vxpose.xlu0.b32.cont [5/16] 0.0, 128
        %550 = vxpose.xlu0.b32.cont [6/16] 0.0, 128
        %551 = vxpose.xlu0.b32.cont [7/16] 0.0, 128
        %552 = vxpose.xlu0.b32.cont [8/16] 0.0, 128
        %553 = vxpose.xlu0.b32.cont [9/16] 0.0, 128
        %554 = vxpose.xlu0.b32.cont [10/16] 0.0, 128
        %555 = vxpose.xlu0.b32.cont [11/16] 0.0, 128
        %556 = vxpose.xlu0.b32.cont [12/16] 0.0, 128
        %557 = vxpose.xlu0.b32.cont [13/16] 0.0, 128
        %558 = vxpose.xlu0.b32.cont [14/16] 0.0, 128
        %559 = vxpose.xlu0.b32.cont [15/16] 0.0, 128
        %560 = vxpose.xlu0.b32.end [16/16] 0.0, 128
        %v561 = vpop.trf.xlu0
        %v562 = vpop.trf.xlu0
        %v563 = vpop.trf.xlu0
        %v564 = vpop.trf.xlu0
        %v565 = vpop.trf.xlu0
        %v566 = vpop.trf.xlu0
        %v567 = vpop.trf.xlu0
        %v568 = vpop.trf.xlu0
        %v569 = vpop.trf.xlu0
        %v570 = vpop.trf.xlu0
        %v571 = vpop.trf.xlu0
        %v572 = vpop.trf.xlu0
        %v573 = vpop.trf.xlu0
        %v574 = vpop.trf.xlu0
        %v575 = vpop.trf.xlu0
        %v576 = vpop.trf.xlu0
        %577 = vxpose.xlu0.b32.start [1/16] %v476, 128
        %578 = vxpose.xlu0.b32.cont [2/16] 0.0, 128
        %579 = vxpose.xlu0.b32.cont [3/16] 0.0, 128
        %580 = vxpose.xlu0.b32.cont [4/16] 0.0, 128
        %581 = vxpose.xlu0.b32.cont [5/16] 0.0, 128
        %582 = vxpose.xlu0.b32.cont [6/16] 0.0, 128
        %583 = vxpose.xlu0.b32.cont [7/16] 0.0, 128
        %584 = vxpose.xlu0.b32.cont [8/16] 0.0, 128
        %585 = vxpose.xlu0.b32.cont [9/16] 0.0, 128
        %586 = vxpose.xlu0.b32.cont [10/16] 0.0, 128
        %587 = vxpose.xlu0.b32.cont [11/16] 0.0, 128
        %588 = vxpose.xlu0.b32.cont [12/16] 0.0, 128
        %589 = vxpose.xlu0.b32.cont [13/16] 0.0, 128
        %590 = vxpose.xlu0.b32.cont [14/16] 0.0, 128
        %591 = vxpose.xlu0.b32.cont [15/16] 0.0, 128
        %592 = vxpose.xlu0.b32.end [16/16] 0.0, 128
        %v593 = vpop.trf.xlu0
        %v594 = vpop.trf.xlu0
        %v595 = vpop.trf.xlu0
        %v596 = vpop.trf.xlu0
        %v597 = vpop.trf.xlu0
        %v598 = vpop.trf.xlu0
        %v599 = vpop.trf.xlu0
        %v600 = vpop.trf.xlu0
        %v601 = vpop.trf.xlu0
        %v602 = vpop.trf.xlu0
        %v603 = vpop.trf.xlu0
        %v604 = vpop.trf.xlu0
        %v605 = vpop.trf.xlu0
        %v606 = vpop.trf.xlu0
        %v607 = vpop.trf.xlu0
        %v608 = vpop.trf.xlu0
        %vm609 = vcmask 64512
        %v610 = vsel %vm609, %v453, 0
        %612 = vmatprep.subr.mxu0 0.0
        %613 = vmatpush1.msra.mxu0 %v497
        %614 = vmatprep.subr.mxu0 0.0
        %615 = vmatpush1.msra.mxu0 0.0
        %616 = vmatprep.subr.mxu0 0.0
        %617 = vmatpush1.msra.mxu0 0.0
        %618 = vmatprep.subr.mxu0 0.0
        %619 = vmatpush1.msra.mxu0 0.0
        %620 = vmatprep.subr.mxu0 0.0
        %621 = vmatpush1.msra.mxu0 0.0
        %622 = vmatprep.subr.mxu0 0.0
        %623 = vmatpush1.msra.mxu0 0.0
        %624 = vmatprep.subr.mxu0 0.0
        %625 = vmatpush1.msra.mxu0 0.0
        %626 = vmatprep.subr.mxu0 0.0
        %627 = vmatpush1.msra.mxu0 0.0
        %628 = vmatprep.subr.mxu0 0.0
        %629 = vmatpush1.msra.mxu0 0.0
        %630 = vmatprep.subr.mxu0 0.0
        %631 = vmatpush1.msra.mxu0 0.0
        %632 = vmatprep.subr.mxu0 0.0
        %633 = vmatpush1.msra.mxu0 0.0
        %634 = vmatprep.subr.mxu0 0.0
        %635 = vmatpush1.msra.mxu0 0.0
        %636 = vmatprep.subr.mxu0 0.0
        %637 = vmatpush1.msra.mxu0 0.0
        %638 = vmatprep.subr.mxu0 0.0
        %639 = vmatpush1.msra.mxu0 0.0
        %640 = vmatprep.subr.mxu0 0.0
        %641 = vmatpush1.msra.mxu0 0.0
        %642 = vmatprep.subr.mxu0 0.0
        %643 = vmatpush1.msra.mxu0 0.0
        %644 = vmatprep.subr.mxu0 0.0
        %645 = vmatpush1.msra.mxu0 0.0
        %646 = vmatprep.subr.mxu0 0.0
        %647 = vmatpush1.msra.mxu0 0.0
        %648 = vmatprep.subr.mxu0 0.0
        %649 = vmatpush1.msra.mxu0 0.0
        %650 = vmatprep.subr.mxu0 0.0
        %651 = vmatpush1.msra.mxu0 0.0
        %652 = vmatprep.subr.mxu0 0.0
        %653 = vmatpush1.msra.mxu0 0.0
        %654 = vmatprep.subr.mxu0 0.0
        %655 = vmatpush1.msra.mxu0 0.0
        %656 = vmatprep.subr.mxu0 0.0
        %657 = vmatpush1.msra.mxu0 0.0
        %658 = vmatprep.subr.mxu0 0.0
        %659 = vmatpush1.msra.mxu0 0.0
        %660 = vmatprep.subr.mxu0 0.0
        %661 = vmatpush1.msra.mxu0 0.0
        %662 = vmatprep.subr.mxu0 0.0
        %663 = vmatpush1.msra.mxu0 0.0
        %664 = vmatprep.subr.mxu0 0.0
        %665 = vmatpush1.msra.mxu0 0.0
        %666 = vmatprep.subr.mxu0 0.0
        %667 = vmatpush1.msra.mxu0 0.0
        %668 = vmatprep.subr.mxu0 0.0
        %669 = vmatpush1.msra.mxu0 0.0
        %670 = vmatprep.subr.mxu0 0.0
        %671 = vmatpush1.msra.mxu0 0.0
        %672 = vmatprep.subr.mxu0 0.0
        %673 = vmatpush1.msra.mxu0 0.0
        %674 = vmatprep.subr.mxu0 0.0
        %675 = vmatpush1.msra.mxu0 0.0
        %676 = vmatprep.mubr.f32.mxu0 0.0
        %677 = vmatmul.mubr.f32.gmra.mrb[0].mxu0 %v610
        %v678 = vpop.f32.mrb[0].mxu0
        %v679 = vadd.f32 0.0, %v678
        %v680 = vpop.f32.mrb[0].mxu0
        %681 = vdwg.mxu0
        %v682 = vsel %vm609, %v457, 0
        %684 = vmatprep.subr.mxu0 0.0
        %685 = vmatpush1.msra.mxu0 %v529
        %686 = vmatprep.subr.mxu0 0.0
        %687 = vmatpush1.msra.mxu0 0.0
        %688 = vmatprep.subr.mxu0 0.0
        %689 = vmatpush1.msra.mxu0 0.0
        %690 = vmatprep.subr.mxu0 0.0
        %691 = vmatpush1.msra.mxu0 0.0
        %692 = vmatprep.subr.mxu0 0.0
        %693 = vmatpush1.msra.mxu0 0.0
        %694 = vmatprep.subr.mxu0 0.0
        %695 = vmatpush1.msra.mxu0 0.0
        %696 = vmatprep.subr.mxu0 0.0
        %697 = vmatpush1.msra.mxu0 0.0
        %698 = vmatprep.subr.mxu0 0.0
        %699 = vmatpush1.msra.mxu0 0.0
        %700 = vmatprep.subr.mxu0 0.0
        %701 = vmatpush1.msra.mxu0 0.0
        %702 = vmatprep.subr.mxu0 0.0
        %703 = vmatpush1.msra.mxu0 0.0
        %704 = vmatprep.subr.mxu0 0.0
        %705 = vmatpush1.msra.mxu0 0.0
        %706 = vmatprep.subr.mxu0 0.0
        %707 = vmatpush1.msra.mxu0 0.0
        %708 = vmatprep.subr.mxu0 0.0
        %709 = vmatpush1.msra.mxu0 0.0
        %710 = vmatprep.subr.mxu0 0.0
        %711 = vmatpush1.msra.mxu0 0.0
        %712 = vmatprep.subr.mxu0 0.0
        %713 = vmatpush1.msra.mxu0 0.0
        %714 = vmatprep.subr.mxu0 0.0
        %715 = vmatpush1.msra.mxu0 0.0
        %716 = vmatprep.subr.mxu0 0.0
        %717 = vmatpush1.msra.mxu0 0.0
        %718 = vmatprep.subr.mxu0 0.0
        %719 = vmatpush1.msra.mxu0 0.0
        %720 = vmatprep.subr.mxu0 0.0
        %721 = vmatpush1.msra.mxu0 0.0
        %722 = vmatprep.subr.mxu0 0.0
        %723 = vmatpush1.msra.mxu0 0.0
        %724 = vmatprep.subr.mxu0 0.0
        %725 = vmatpush1.msra.mxu0 0.0
        %726 = vmatprep.subr.mxu0 0.0
        %727 = vmatpush1.msra.mxu0 0.0
        %728 = vmatprep.subr.mxu0 0.0
        %729 = vmatpush1.msra.mxu0 0.0
        %730 = vmatprep.subr.mxu0 0.0
        %731 = vmatpush1.msra.mxu0 0.0
        %732 = vmatprep.subr.mxu0 0.0
        %733 = vmatpush1.msra.mxu0 0.0
        %734 = vmatprep.subr.mxu0 0.0
        %735 = vmatpush1.msra.mxu0 0.0
        %736 = vmatprep.subr.mxu0 0.0
        %737 = vmatpush1.msra.mxu0 0.0
        %738 = vmatprep.subr.mxu0 0.0
        %739 = vmatpush1.msra.mxu0 0.0
        %740 = vmatprep.subr.mxu0 0.0
        %741 = vmatpush1.msra.mxu0 0.0
        %742 = vmatprep.subr.mxu0 0.0
        %743 = vmatpush1.msra.mxu0 0.0
        %744 = vmatprep.subr.mxu0 0.0
        %745 = vmatpush1.msra.mxu0 0.0
        %746 = vmatprep.subr.mxu0 0.0
        %747 = vmatpush1.msra.mxu0 0.0
        %748 = vmatprep.mubr.f32.mxu0 0.0
        %749 = vmatmul.mubr.f32.gmra.mrb[0].mxu0 %v682
        %v750 = vpop.f32.mrb[0].mxu0
        %v751 = vadd.f32 0.0, %v750
        %v752 = vpop.f32.mrb[0].mxu0
        %753 = vdwg.mxu0
        %v754 = vsel %vm609, %v459, 0
        %756 = vmatprep.subr.mxu0 0.0
        %757 = vmatpush1.msra.mxu0 %v561
        %758 = vmatprep.subr.mxu0 0.0
        %759 = vmatpush1.msra.mxu0 0.0
        %760 = vmatprep.subr.mxu0 0.0
        %761 = vmatpush1.msra.mxu0 0.0
        %762 = vmatprep.subr.mxu0 0.0
        %763 = vmatpush1.msra.mxu0 0.0
        %764 = vmatprep.subr.mxu0 0.0
        %765 = vmatpush1.msra.mxu0 0.0
        %766 = vmatprep.subr.mxu0 0.0
        %767 = vmatpush1.msra.mxu0 0.0
        %768 = vmatprep.subr.mxu0 0.0
        %769 = vmatpush1.msra.mxu0 0.0
        %770 = vmatprep.subr.mxu0 0.0
        %771 = vmatpush1.msra.mxu0 0.0
        %772 = vmatprep.subr.mxu0 0.0
        %773 = vmatpush1.msra.mxu0 0.0
        %774 = vmatprep.subr.mxu0 0.0
        %775 = vmatpush1.msra.mxu0 0.0
        %776 = vmatprep.subr.mxu0 0.0
        %777 = vmatpush1.msra.mxu0 0.0
        %778 = vmatprep.subr.mxu0 0.0
        %779 = vmatpush1.msra.mxu0 0.0
        %780 = vmatprep.subr.mxu0 0.0
        %781 = vmatpush1.msra.mxu0 0.0
        %782 = vmatprep.subr.mxu0 0.0
        %783 = vmatpush1.msra.mxu0 0.0
        %784 = vmatprep.subr.mxu0 0.0
        %785 = vmatpush1.msra.mxu0 0.0
        %786 = vmatprep.subr.mxu0 0.0
        %787 = vmatpush1.msra.mxu0 0.0
        %788 = vmatprep.subr.mxu0 0.0
        %789 = vmatpush1.msra.mxu0 0.0
        %790 = vmatprep.subr.mxu0 0.0
        %791 = vmatpush1.msra.mxu0 0.0
        %792 = vmatprep.subr.mxu0 0.0
        %793 = vmatpush1.msra.mxu0 0.0
        %794 = vmatprep.subr.mxu0 0.0
        %795 = vmatpush1.msra.mxu0 0.0
        %796 = vmatprep.subr.mxu0 0.0
        %797 = vmatpush1.msra.mxu0 0.0
        %798 = vmatprep.subr.mxu0 0.0
        %799 = vmatpush1.msra.mxu0 0.0
        %800 = vmatprep.subr.mxu0 0.0
        %801 = vmatpush1.msra.mxu0 0.0
        %802 = vmatprep.subr.mxu0 0.0
        %803 = vmatpush1.msra.mxu0 0.0
        %804 = vmatprep.subr.mxu0 0.0
        %805 = vmatpush1.msra.mxu0 0.0
        %806 = vmatprep.subr.mxu0 0.0
        %807 = vmatpush1.msra.mxu0 0.0
        %808 = vmatprep.subr.mxu0 0.0
        %809 = vmatpush1.msra.mxu0 0.0
        %810 = vmatprep.subr.mxu0 0.0
        %811 = vmatpush1.msra.mxu0 0.0
        %812 = vmatprep.subr.mxu0 0.0
        %813 = vmatpush1.msra.mxu0 0.0
        %814 = vmatprep.subr.mxu0 0.0
        %815 = vmatpush1.msra.mxu0 0.0
        %816 = vmatprep.subr.mxu0 0.0
        %817 = vmatpush1.msra.mxu0 0.0
        %818 = vmatprep.subr.mxu0 0.0
        %819 = vmatpush1.msra.mxu0 0.0
        %820 = vmatprep.mubr.f32.mxu0 0.0
        %821 = vmatmul.mubr.f32.gmra.mrb[0].mxu0 %v754
        %v822 = vpop.f32.mrb[0].mxu0
        %v823 = vadd.f32 0.0, %v822
        %v824 = vpop.f32.mrb[0].mxu0
        %825 = vdwg.mxu0
        %v826 = vsel %vm609, %v461, 0
        %828 = vmatprep.subr.mxu0 0.0
        %829 = vmatpush1.msra.mxu0 %v593
        %830 = vmatprep.subr.mxu0 0.0
        %831 = vmatpush1.msra.mxu0 0.0
        %832 = vmatprep.subr.mxu0 0.0
        %833 = vmatpush1.msra.mxu0 0.0
        %834 = vmatprep.subr.mxu0 0.0
        %835 = vmatpush1.msra.mxu0 0.0
        %836 = vmatprep.subr.mxu0 0.0
        %837 = vmatpush1.msra.mxu0 0.0
        %838 = vmatprep.subr.mxu0 0.0
        %839 = vmatpush1.msra.mxu0 0.0
        %840 = vmatprep.subr.mxu0 0.0
        %841 = vmatpush1.msra.mxu0 0.0
        %842 = vmatprep.subr.mxu0 0.0
        %843 = vmatpush1.msra.mxu0 0.0
        %844 = vmatprep.subr.mxu0 0.0
        %845 = vmatpush1.msra.mxu0 0.0
        %846 = vmatprep.subr.mxu0 0.0
        %847 = vmatpush1.msra.mxu0 0.0
        %848 = vmatprep.subr.mxu0 0.0
        %849 = vmatpush1.msra.mxu0 0.0
        %850 = vmatprep.subr.mxu0 0.0
        %851 = vmatpush1.msra.mxu0 0.0
        %852 = vmatprep.subr.mxu0 0.0
        %853 = vmatpush1.msra.mxu0 0.0
        %854 = vmatprep.subr.mxu0 0.0
        %855 = vmatpush1.msra.mxu0 0.0
        %856 = vmatprep.subr.mxu0 0.0
        %857 = vmatpush1.msra.mxu0 0.0
        %858 = vmatprep.subr.mxu0 0.0
        %859 = vmatpush1.msra.mxu0 0.0
        %860 = vmatprep.subr.mxu0 0.0
        %861 = vmatpush1.msra.mxu0 0.0
        %862 = vmatprep.subr.mxu0 0.0
        %863 = vmatpush1.msra.mxu0 0.0
        %864 = vmatprep.subr.mxu0 0.0
        %865 = vmatpush1.msra.mxu0 0.0
        %866 = vmatprep.subr.mxu0 0.0
        %867 = vmatpush1.msra.mxu0 0.0
        %868 = vmatprep.subr.mxu0 0.0
        %869 = vmatpush1.msra.mxu0 0.0
        %870 = vmatprep.subr.mxu0 0.0
        %871 = vmatpush1.msra.mxu0 0.0
        %872 = vmatprep.subr.mxu0 0.0
        %873 = vmatpush1.msra.mxu0 0.0
        %874 = vmatprep.subr.mxu0 0.0
        %875 = vmatpush1.msra.mxu0 0.0
        %876 = vmatprep.subr.mxu0 0.0
        %877 = vmatpush1.msra.mxu0 0.0
        %878 = vmatprep.subr.mxu0 0.0
        %879 = vmatpush1.msra.mxu0 0.0
        %880 = vmatprep.subr.mxu0 0.0
        %881 = vmatpush1.msra.mxu0 0.0
        %882 = vmatprep.subr.mxu0 0.0
        %883 = vmatpush1.msra.mxu0 0.0
        %884 = vmatprep.subr.mxu0 0.0
        %885 = vmatpush1.msra.mxu0 0.0
        %886 = vmatprep.subr.mxu0 0.0
        %887 = vmatpush1.msra.mxu0 0.0
        %888 = vmatprep.subr.mxu0 0.0
        %889 = vmatpush1.msra.mxu0 0.0
        %890 = vmatprep.subr.mxu0 0.0
        %891 = vmatpush1.msra.mxu0 0.0
        %892 = vmatprep.mubr.f32.mxu0 0.0
        %893 = vmatmul.mubr.f32.gmra.mrb[0].mxu0 %v826
        %v894 = vpop.f32.mrb[0].mxu0
        %v895 = vadd.f32 0.0, %v894
        %v896 = vpop.f32.mrb[0].mxu0
        %897 = vdwg.mxu0
        %v898 = vmul.f32 %v679, 0.35355338
        %v899 = vmul.f32 %v751, 0.35355338
        %v900 = vmul.f32 %v823, 0.35355338
        %v901 = vmul.f32 %v895, 0.35355338
        %v902 = vsel %vm609, %v898, -inf
        %903 = vmax.xlane.f32.xlu0 %v902
        %v904 = vpop.xlane.xlu0 %903
        %v905 = vsel %vm609, %v899, -inf
        %906 = vmax.xlane.f32.xlu0 %v905
        %v907 = vpop.xlane.xlu0 %906
        %v908 = vsel %vm609, %v900, -inf
        %909 = vmax.xlane.f32.xlu0 %v908
        %v910 = vpop.xlane.xlu0 %909
        %v911 = vsel %vm609, %v901, -inf
        %912 = vmax.xlane.f32.xlu0 %v911
        %v913 = vpop.xlane.xlu0 %912
        %v914 = vsub.f32 %v898, %v904
        %v915 = vsub.f32 %v899, %v907
        %v916 = vsub.f32 %v900, %v910
        %v917 = vsub.f32 %v901, %v913
        %v918 = vmul.f32 %v914, 1.442695
        %v919 = vpow.pop %v918
        %v920 = vmul.f32 %v915, 1.442695
        %v921 = vpow.pop %v920
        %v922 = vmul.f32 %v916, 1.442695
        %v923 = vpow.pop %v922
        %v924 = vmul.f32 %v917, 1.442695
        %v925 = vpow.pop %v924
        %v926 = vsel %vm609, %v919, 0.0
        %927 = vadd.xlane.f32.xlu0 %v926
        %v928 = vpop.xlane.xlu0 %927
        %v929 = vsel %vm609, %v921, 0.0
        %930 = vadd.xlane.f32.xlu0 %v929
        %v931 = vpop.xlane.xlu0 %930
        %v932 = vsel %vm609, %v923, 0.0
        %933 = vadd.xlane.f32.xlu0 %v932
        %v934 = vpop.xlane.xlu0 %933
        %v935 = vsel %vm609, %v925, 0.0
        %936 = vadd.xlane.f32.xlu0 %v935
        %v937 = vpop.xlane.xlu0 %936
        %v938 = vrcp.pop %v928
        %v939 = vrcp.pop %v931
        %v940 = vrcp.pop %v934
        %v941 = vrcp.pop %v937
        %v942 = vmul.f32 %v919, %v938
        %v943 = vmul.f32 %v921, %v939
        %v944 = vmul.f32 %v923, %v940
        %v945 = vmul.f32 %v925, %v941
        %vm946 = vcmp.ge.f32.partialorder %v942, 0.1
        %vm947 = vcmp.ge.f32.partialorder %v943, 0.1
        %vm948 = vcmp.ge.f32.partialorder %v944, 0.1
        %vm949 = vcmp.ge.f32.partialorder %v945, 0.1
        %v950 = vsel %vm946, %v942, 0.0
        %v951 = vsel %vm947, %v943, 0.0
        %v952 = vsel %vm948, %v944, 0.0
        %v953 = vsel %vm949, %v945, 0.0
        %954 = vrot.lane.b32.xlu0 %v454, 64
        %v955 = vpop.permute.xlu0 %954
        %956 = vrot.lane.b32.xlu0 %v464, 64
        %v957 = vpop.permute.xlu0 %956
        %958 = vrot.lane.b32.xlu0 %v466, 64
        %v959 = vpop.permute.xlu0 %958
        %960 = vrot.lane.b32.xlu0 %v468, 64
        %v961 = vpop.permute.xlu0 %960
        %966 = vxpose.xlu0.b32.start [1/16] %v955, 128
        %967 = vxpose.xlu0.b32.cont [2/16] 0.0, 128
        %968 = vxpose.xlu0.b32.cont [3/16] 0.0, 128
        %969 = vxpose.xlu0.b32.cont [4/16] 0.0, 128
        %970 = vxpose.xlu0.b32.cont [5/16] 0.0, 128
        %971 = vxpose.xlu0.b32.cont [6/16] 0.0, 128
        %972 = vxpose.xlu0.b32.cont [7/16] 0.0, 128
        %973 = vxpose.xlu0.b32.cont [8/16] 0.0, 128
        %974 = vxpose.xlu0.b32.cont [9/16] 0.0, 128
        %975 = vxpose.xlu0.b32.cont [10/16] 0.0, 128
        %976 = vxpose.xlu0.b32.cont [11/16] 0.0, 128
        %977 = vxpose.xlu0.b32.cont [12/16] 0.0, 128
        %978 = vxpose.xlu0.b32.cont [13/16] 0.0, 128
        %979 = vxpose.xlu0.b32.cont [14/16] 0.0, 128
        %980 = vxpose.xlu0.b32.cont [15/16] 0.0, 128
        %981 = vxpose.xlu0.b32.end [16/16] 0.0, 128
        %v982 = vpop.trf.xlu0
        %v983 = vpop.trf.xlu0
        %v984 = vpop.trf.xlu0
        %v985 = vpop.trf.xlu0
        %v986 = vpop.trf.xlu0
        %v987 = vpop.trf.xlu0
        %v988 = vpop.trf.xlu0
        %v989 = vpop.trf.xlu0
        %v990 = vpop.trf.xlu0
        %v991 = vpop.trf.xlu0
        %v992 = vpop.trf.xlu0
        %v993 = vpop.trf.xlu0
        %v994 = vpop.trf.xlu0
        %v995 = vpop.trf.xlu0
        %v996 = vpop.trf.xlu0
        %v997 = vpop.trf.xlu0
        %998 = vxpose.xlu0.b32.start [1/16] %v957, 128
        %999 = vxpose.xlu0.b32.cont [2/16] 0.0, 128
        %1000 = vxpose.xlu0.b32.cont [3/16] 0.0, 128
        %1001 = vxpose.xlu0.b32.cont [4/16] 0.0, 128
        %1002 = vxpose.xlu0.b32.cont [5/16] 0.0, 128
        %1003 = vxpose.xlu0.b32.cont [6/16] 0.0, 128
        %1004 = vxpose.xlu0.b32.cont [7/16] 0.0, 128
        %1005 = vxpose.xlu0.b32.cont [8/16] 0.0, 128
        %1006 = vxpose.xlu0.b32.cont [9/16] 0.0, 128
        %1007 = vxpose.xlu0.b32.cont [10/16] 0.0, 128
        %1008 = vxpose.xlu0.b32.cont [11/16] 0.0, 128
        %1009 = vxpose.xlu0.b32.cont [12/16] 0.0, 128
        %1010 = vxpose.xlu0.b32.cont [13/16] 0.0, 128
        %1011 = vxpose.xlu0.b32.cont [14/16] 0.0, 128
        %1012 = vxpose.xlu0.b32.cont [15/16] 0.0, 128
        %1013 = vxpose.xlu0.b32.end [16/16] 0.0, 128
        %v1014 = vpop.trf.xlu0
        %v1015 = vpop.trf.xlu0
        %v1016 = vpop.trf.xlu0
        %v1017 = vpop.trf.xlu0
        %v1018 = vpop.trf.xlu0
        %v1019 = vpop.trf.xlu0
        %v1020 = vpop.trf.xlu0
        %v1021 = vpop.trf.xlu0
        %v1022 = vpop.trf.xlu0
        %v1023 = vpop.trf.xlu0
        %v1024 = vpop.trf.xlu0
        %v1025 = vpop.trf.xlu0
        %v1026 = vpop.trf.xlu0
        %v1027 = vpop.trf.xlu0
        %v1028 = vpop.trf.xlu0
        %v1029 = vpop.trf.xlu0
        %1030 = vxpose.xlu0.b32.start [1/16] %v959, 128
        %1031 = vxpose.xlu0.b32.cont [2/16] 0.0, 128
        %1032 = vxpose.xlu0.b32.cont [3/16] 0.0, 128
        %1033 = vxpose.xlu0.b32.cont [4/16] 0.0, 128
        %1034 = vxpose.xlu0.b32.cont [5/16] 0.0, 128
        %1035 = vxpose.xlu0.b32.cont [6/16] 0.0, 128
        %1036 = vxpose.xlu0.b32.cont [7/16] 0.0, 128
        %1037 = vxpose.xlu0.b32.cont [8/16] 0.0, 128
        %1038 = vxpose.xlu0.b32.cont [9/16] 0.0, 128
        %1039 = vxpose.xlu0.b32.cont [10/16] 0.0, 128
        %1040 = vxpose.xlu0.b32.cont [11/16] 0.0, 128
        %1041 = vxpose.xlu0.b32.cont [12/16] 0.0, 128
        %1042 = vxpose.xlu0.b32.cont [13/16] 0.0, 128
        %1043 = vxpose.xlu0.b32.cont [14/16] 0.0, 128
        %1044 = vxpose.xlu0.b32.cont [15/16] 0.0, 128
        %1045 = vxpose.xlu0.b32.end [16/16] 0.0, 128
        %v1046 = vpop.trf.xlu0
        %v1047 = vpop.trf.xlu0
        %v1048 = vpop.trf.xlu0
        %v1049 = vpop.trf.xlu0
        %v1050 = vpop.trf.xlu0
        %v1051 = vpop.trf.xlu0
        %v1052 = vpop.trf.xlu0
        %v1053 = vpop.trf.xlu0
        %v1054 = vpop.trf.xlu0
        %v1055 = vpop.trf.xlu0
        %v1056 = vpop.trf.xlu0
        %v1057 = vpop.trf.xlu0
        %v1058 = vpop.trf.xlu0
        %v1059 = vpop.trf.xlu0
        %v1060 = vpop.trf.xlu0
        %v1061 = vpop.trf.xlu0
        %1062 = vxpose.xlu0.b32.start [1/16] %v961, 128
        %1063 = vxpose.xlu0.b32.cont [2/16] 0.0, 128
        %1064 = vxpose.xlu0.b32.cont [3/16] 0.0, 128
        %1065 = vxpose.xlu0.b32.cont [4/16] 0.0, 128
        %1066 = vxpose.xlu0.b32.cont [5/16] 0.0, 128
        %1067 = vxpose.xlu0.b32.cont [6/16] 0.0, 128
        %1068 = vxpose.xlu0.b32.cont [7/16] 0.0, 128
        %1069 = vxpose.xlu0.b32.cont [8/16] 0.0, 128
        %1070 = vxpose.xlu0.b32.cont [9/16] 0.0, 128
        %1071 = vxpose.xlu0.b32.cont [10/16] 0.0, 128
        %1072 = vxpose.xlu0.b32.cont [11/16] 0.0, 128
        %1073 = vxpose.xlu0.b32.cont [12/16] 0.0, 128
        %1074 = vxpose.xlu0.b32.cont [13/16] 0.0, 128
        %1075 = vxpose.xlu0.b32.cont [14/16] 0.0, 128
        %1076 = vxpose.xlu0.b32.cont [15/16] 0.0, 128
        %1077 = vxpose.xlu0.b32.end [16/16] 0.0, 128
        %v1078 = vpop.trf.xlu0
        %v1079 = vpop.trf.xlu0
        %v1080 = vpop.trf.xlu0
        %v1081 = vpop.trf.xlu0
        %v1082 = vpop.trf.xlu0
        %v1083 = vpop.trf.xlu0
        %v1084 = vpop.trf.xlu0
        %v1085 = vpop.trf.xlu0
        %v1086 = vpop.trf.xlu0
        %v1087 = vpop.trf.xlu0
        %v1088 = vpop.trf.xlu0
        %v1089 = vpop.trf.xlu0
        %v1090 = vpop.trf.xlu0
        %v1091 = vpop.trf.xlu0
        %v1092 = vpop.trf.xlu0
        %v1093 = vpop.trf.xlu0
        %v1095 = vsel %vm609, %v982, 0
        %v1098 = vsel %vm609, %v950, 0
        %1100 = vmatprep.subr.mxu0 0.0
        %1101 = vmatpush1.xpose.msra.mxu0 %v1098
        %1102 = vmatprep.subr.mxu0 0.0
        %1103 = vmatpush1.xpose.msra.mxu0 0.0
        %1104 = vmatprep.subr.mxu0 0.0
        %1105 = vmatpush1.xpose.msra.mxu0 0.0
        %1106 = vmatprep.subr.mxu0 0.0
        %1107 = vmatpush1.xpose.msra.mxu0 0.0
        %1108 = vmatprep.subr.mxu0 0.0
        %1109 = vmatpush1.xpose.msra.mxu0 0.0
        %1110 = vmatprep.subr.mxu0 0.0
        %1111 = vmatpush1.xpose.msra.mxu0 0.0
        %1112 = vmatprep.subr.mxu0 0.0
        %1113 = vmatpush1.xpose.msra.mxu0 0.0
        %1114 = vmatprep.subr.mxu0 0.0
        %1115 = vmatpush1.xpose.msra.mxu0 0.0
        %1116 = vmatprep.subr.mxu0 0.0
        %1117 = vmatpush1.xpose.msra.mxu0 0.0
        %1118 = vmatprep.subr.mxu0 0.0
        %1119 = vmatpush1.xpose.msra.mxu0 0.0
        %1120 = vmatprep.subr.mxu0 0.0
        %1121 = vmatpush1.xpose.msra.mxu0 0.0
        %1122 = vmatprep.subr.mxu0 0.0
        %1123 = vmatpush1.xpose.msra.mxu0 0.0
        %1124 = vmatprep.subr.mxu0 0.0
        %1125 = vmatpush1.xpose.msra.mxu0 0.0
        %1126 = vmatprep.subr.mxu0 0.0
        %1127 = vmatpush1.xpose.msra.mxu0 0.0
        %1128 = vmatprep.subr.mxu0 0.0
        %1129 = vmatpush1.xpose.msra.mxu0 0.0
        %1130 = vmatprep.subr.mxu0 0.0
        %1131 = vmatpush1.xpose.msra.mxu0 0.0
        %1132 = vmatprep.subr.mxu0 0.0
        %1133 = vmatpush1.xpose.msra.mxu0 0.0
        %1134 = vmatprep.subr.mxu0 0.0
        %1135 = vmatpush1.xpose.msra.mxu0 0.0
        %1136 = vmatprep.subr.mxu0 0.0
        %1137 = vmatpush1.xpose.msra.mxu0 0.0
        %1138 = vmatprep.subr.mxu0 0.0
        %1139 = vmatpush1.xpose.msra.mxu0 0.0
        %1140 = vmatprep.subr.mxu0 0.0
        %1141 = vmatpush1.xpose.msra.mxu0 0.0
        %1142 = vmatprep.subr.mxu0 0.0
        %1143 = vmatpush1.xpose.msra.mxu0 0.0
        %1144 = vmatprep.subr.mxu0 0.0
        %1145 = vmatpush1.xpose.msra.mxu0 0.0
        %1146 = vmatprep.subr.mxu0 0.0
        %1147 = vmatpush1.xpose.msra.mxu0 0.0
        %1148 = vmatprep.subr.mxu0 0.0
        %1149 = vmatpush1.xpose.msra.mxu0 0.0
        %1150 = vmatprep.subr.mxu0 0.0
        %1151 = vmatpush1.xpose.msra.mxu0 0.0
        %1152 = vmatprep.subr.mxu0 0.0
        %1153 = vmatpush1.xpose.msra.mxu0 0.0
        %1154 = vmatprep.subr.mxu0 0.0
        %1155 = vmatpush1.xpose.msra.mxu0 0.0
        %1156 = vmatprep.subr.mxu0 0.0
        %1157 = vmatpush1.xpose.msra.mxu0 0.0
        %1158 = vmatprep.subr.mxu0 0.0
        %1159 = vmatpush1.xpose.msra.mxu0 0.0
        %1160 = vmatprep.subr.mxu0 0.0
        %1161 = vmatpush1.xpose.msra.mxu0 0.0
        %1162 = vmatprep.subr.mxu0 0.0
        %1163 = vmatpush1.xpose.msra.mxu0 0.0
        %1164 = vmatprep.mubr.f32.mxu0 0.0
        %1165 = vmatmul.mubr.f32.gmra.mrb[0].mxu0 %v1095
        %v1166 = vpop.f32.mrb[0].mxu0
        %v1167 = vadd.f32 0.0, %v1166
        %v1168 = vpop.f32.mrb[0].mxu0
        %1169 = vdwg.mxu0
        %v1171 = vsel %vm609, %v1014, 0
        %v1174 = vsel %vm609, %v951, 0
        %1176 = vmatprep.subr.mxu0 0.0
        %1177 = vmatpush1.xpose.msra.mxu0 %v1174
        %1178 = vmatprep.subr.mxu0 0.0
        %1179 = vmatpush1.xpose.msra.mxu0 0.0
        %1180 = vmatprep.subr.mxu0 0.0
        %1181 = vmatpush1.xpose.msra.mxu0 0.0
        %1182 = vmatprep.subr.mxu0 0.0
        %1183 = vmatpush1.xpose.msra.mxu0 0.0
        %1184 = vmatprep.subr.mxu0 0.0
        %1185 = vmatpush1.xpose.msra.mxu0 0.0
        %1186 = vmatprep.subr.mxu0 0.0
        %1187 = vmatpush1.xpose.msra.mxu0 0.0
        %1188 = vmatprep.subr.mxu0 0.0
        %1189 = vmatpush1.xpose.msra.mxu0 0.0
        %1190 = vmatprep.subr.mxu0 0.0
        %1191 = vmatpush1.xpose.msra.mxu0 0.0
        %1192 = vmatprep.subr.mxu0 0.0
        %1193 = vmatpush1.xpose.msra.mxu0 0.0
        %1194 = vmatprep.subr.mxu0 0.0
        %1195 = vmatpush1.xpose.msra.mxu0 0.0
        %1196 = vmatprep.subr.mxu0 0.0
        %1197 = vmatpush1.xpose.msra.mxu0 0.0
        %1198 = vmatprep.subr.mxu0 0.0
        %1199 = vmatpush1.xpose.msra.mxu0 0.0
        %1200 = vmatprep.subr.mxu0 0.0
        %1201 = vmatpush1.xpose.msra.mxu0 0.0
        %1202 = vmatprep.subr.mxu0 0.0
        %1203 = vmatpush1.xpose.msra.mxu0 0.0
        %1204 = vmatprep.subr.mxu0 0.0
        %1205 = vmatpush1.xpose.msra.mxu0 0.0
        %1206 = vmatprep.subr.mxu0 0.0
        %1207 = vmatpush1.xpose.msra.mxu0 0.0
        %1208 = vmatprep.subr.mxu0 0.0
        %1209 = vmatpush1.xpose.msra.mxu0 0.0
        %1210 = vmatprep.subr.mxu0 0.0
        %1211 = vmatpush1.xpose.msra.mxu0 0.0
        %1212 = vmatprep.subr.mxu0 0.0
        %1213 = vmatpush1.xpose.msra.mxu0 0.0
        %1214 = vmatprep.subr.mxu0 0.0
        %1215 = vmatpush1.xpose.msra.mxu0 0.0
        %1216 = vmatprep.subr.mxu0 0.0
        %1217 = vmatpush1.xpose.msra.mxu0 0.0
        %1218 = vmatprep.subr.mxu0 0.0
        %1219 = vmatpush1.xpose.msra.mxu0 0.0
        %1220 = vmatprep.subr.mxu0 0.0
        %1221 = vmatpush1.xpose.msra.mxu0 0.0
        %1222 = vmatprep.subr.mxu0 0.0
        %1223 = vmatpush1.xpose.msra.mxu0 0.0
        %1224 = vmatprep.subr.mxu0 0.0
        %1225 = vmatpush1.xpose.msra.mxu0 0.0
        %1226 = vmatprep.subr.mxu0 0.0
        %1227 = vmatpush1.xpose.msra.mxu0 0.0
        %1228 = vmatprep.subr.mxu0 0.0
        %1229 = vmatpush1.xpose.msra.mxu0 0.0
        %1230 = vmatprep.subr.mxu0 0.0
        %1231 = vmatpush1.xpose.msra.mxu0 0.0
        %1232 = vmatprep.subr.mxu0 0.0
        %1233 = vmatpush1.xpose.msra.mxu0 0.0
        %1234 = vmatprep.subr.mxu0 0.0
        %1235 = vmatpush1.xpose.msra.mxu0 0.0
        %1236 = vmatprep.subr.mxu0 0.0
        %1237 = vmatpush1.xpose.msra.mxu0 0.0
        %1238 = vmatprep.subr.mxu0 0.0
        %1239 = vmatpush1.xpose.msra.mxu0 0.0
        %1240 = vmatprep.mubr.f32.mxu0 0.0
        %1241 = vmatmul.mubr.f32.gmra.mrb[0].mxu0 %v1171
        %v1242 = vpop.f32.mrb[0].mxu0
        %v1243 = vadd.f32 0.0, %v1242
        %v1244 = vpop.f32.mrb[0].mxu0
        %1245 = vdwg.mxu0
        %v1247 = vsel %vm609, %v1046, 0
        %v1250 = vsel %vm609, %v952, 0
        %1252 = vmatprep.subr.mxu0 0.0
        %1253 = vmatpush1.xpose.msra.mxu0 %v1250
        %1254 = vmatprep.subr.mxu0 0.0
        %1255 = vmatpush1.xpose.msra.mxu0 0.0
        %1256 = vmatprep.subr.mxu0 0.0
        %1257 = vmatpush1.xpose.msra.mxu0 0.0
        %1258 = vmatprep.subr.mxu0 0.0
        %1259 = vmatpush1.xpose.msra.mxu0 0.0
        %1260 = vmatprep.subr.mxu0 0.0
        %1261 = vmatpush1.xpose.msra.mxu0 0.0
        %1262 = vmatprep.subr.mxu0 0.0
        %1263 = vmatpush1.xpose.msra.mxu0 0.0
        %1264 = vmatprep.subr.mxu0 0.0
        %1265 = vmatpush1.xpose.msra.mxu0 0.0
        %1266 = vmatprep.subr.mxu0 0.0
        %1267 = vmatpush1.xpose.msra.mxu0 0.0
        %1268 = vmatprep.subr.mxu0 0.0
        %1269 = vmatpush1.xpose.msra.mxu0 0.0
        %1270 = vmatprep.subr.mxu0 0.0
        %1271 = vmatpush1.xpose.msra.mxu0 0.0
        %1272 = vmatprep.subr.mxu0 0.0
        %1273 = vmatpush1.xpose.msra.mxu0 0.0
        %1274 = vmatprep.subr.mxu0 0.0
        %1275 = vmatpush1.xpose.msra.mxu0 0.0
        %1276 = vmatprep.subr.mxu0 0.0
        %1277 = vmatpush1.xpose.msra.mxu0 0.0
        %1278 = vmatprep.subr.mxu0 0.0
        %1279 = vmatpush1.xpose.msra.mxu0 0.0
        %1280 = vmatprep.subr.mxu0 0.0
        %1281 = vmatpush1.xpose.msra.mxu0 0.0
        %1282 = vmatprep.subr.mxu0 0.0
        %1283 = vmatpush1.xpose.msra.mxu0 0.0
        %1284 = vmatprep.subr.mxu0 0.0
        %1285 = vmatpush1.xpose.msra.mxu0 0.0
        %1286 = vmatprep.subr.mxu0 0.0
        %1287 = vmatpush1.xpose.msra.mxu0 0.0
        %1288 = vmatprep.subr.mxu0 0.0
        %1289 = vmatpush1.xpose.msra.mxu0 0.0
        %1290 = vmatprep.subr.mxu0 0.0
        %1291 = vmatpush1.xpose.msra.mxu0 0.0
        %1292 = vmatprep.subr.mxu0 0.0
        %1293 = vmatpush1.xpose.msra.mxu0 0.0
        %1294 = vmatprep.subr.mxu0 0.0
        %1295 = vmatpush1.xpose.msra.mxu0 0.0
        %1296 = vmatprep.subr.mxu0 0.0
        %1297 = vmatpush1.xpose.msra.mxu0 0.0
        %1298 = vmatprep.subr.mxu0 0.0
        %1299 = vmatpush1.xpose.msra.mxu0 0.0
        %1300 = vmatprep.subr.mxu0 0.0
        %1301 = vmatpush1.xpose.msra.mxu0 0.0
        %1302 = vmatprep.subr.mxu0 0.0
        %1303 = vmatpush1.xpose.msra.mxu0 0.0
        %1304 = vmatprep.subr.mxu0 0.0
        %1305 = vmatpush1.xpose.msra.mxu0 0.0
        %1306 = vmatprep.subr.mxu0 0.0
        %1307 = vmatpush1.xpose.msra.mxu0 0.0
        %1308 = vmatprep.subr.mxu0 0.0
        %1309 = vmatpush1.xpose.msra.mxu0 0.0
        %1310 = vmatprep.subr.mxu0 0.0
        %1311 = vmatpush1.xpose.msra.mxu0 0.0
        %1312 = vmatprep.subr.mxu0 0.0
        %1313 = vmatpush1.xpose.msra.mxu0 0.0
        %1314 = vmatprep.subr.mxu0 0.0
        %1315 = vmatpush1.xpose.msra.mxu0 0.0
        %1316 = vmatprep.mubr.f32.mxu0 0.0
        %1317 = vmatmul.mubr.f32.gmra.mrb[0].mxu0 %v1247
        %v1318 = vpop.f32.mrb[0].mxu0
        %v1319 = vadd.f32 0.0, %v1318
        %v1320 = vpop.f32.mrb[0].mxu0
        %1321 = vdwg.mxu0
        %v1323 = vsel %vm609, %v1078, 0
        %v1326 = vsel %vm609, %v953, 0
        %1328 = vmatprep.subr.mxu0 0.0
        %1329 = vmatpush1.xpose.msra.mxu0 %v1326
        %1330 = vmatprep.subr.mxu0 0.0
        %1331 = vmatpush1.xpose.msra.mxu0 0.0
        %1332 = vmatprep.subr.mxu0 0.0
        %1333 = vmatpush1.xpose.msra.mxu0 0.0
        %1334 = vmatprep.subr.mxu0 0.0
        %1335 = vmatpush1.xpose.msra.mxu0 0.0
        %1336 = vmatprep.subr.mxu0 0.0
        %1337 = vmatpush1.xpose.msra.mxu0 0.0
        %1338 = vmatprep.subr.mxu0 0.0
        %1339 = vmatpush1.xpose.msra.mxu0 0.0
        %1340 = vmatprep.subr.mxu0 0.0
        %1341 = vmatpush1.xpose.msra.mxu0 0.0
        %1342 = vmatprep.subr.mxu0 0.0
        %1343 = vmatpush1.xpose.msra.mxu0 0.0
        %1344 = vmatprep.subr.mxu0 0.0
        %1345 = vmatpush1.xpose.msra.mxu0 0.0
        %1346 = vmatprep.subr.mxu0 0.0
        %1347 = vmatpush1.xpose.msra.mxu0 0.0
        %1348 = vmatprep.subr.mxu0 0.0
        %1349 = vmatpush1.xpose.msra.mxu0 0.0
        %1350 = vmatprep.subr.mxu0 0.0
        %1351 = vmatpush1.xpose.msra.mxu0 0.0
        %1352 = vmatprep.subr.mxu0 0.0
        %1353 = vmatpush1.xpose.msra.mxu0 0.0
        %1354 = vmatprep.subr.mxu0 0.0
        %1355 = vmatpush1.xpose.msra.mxu0 0.0
        %1356 = vmatprep.subr.mxu0 0.0
        %1357 = vmatpush1.xpose.msra.mxu0 0.0
        %1358 = vmatprep.subr.mxu0 0.0
        %1359 = vmatpush1.xpose.msra.mxu0 0.0
        %1360 = vmatprep.subr.mxu0 0.0
        %1361 = vmatpush1.xpose.msra.mxu0 0.0
        %1362 = vmatprep.subr.mxu0 0.0
        %1363 = vmatpush1.xpose.msra.mxu0 0.0
        %1364 = vmatprep.subr.mxu0 0.0
        %1365 = vmatpush1.xpose.msra.mxu0 0.0
        %1366 = vmatprep.subr.mxu0 0.0
        %1367 = vmatpush1.xpose.msra.mxu0 0.0
        %1368 = vmatprep.subr.mxu0 0.0
        %1369 = vmatpush1.xpose.msra.mxu0 0.0
        %1370 = vmatprep.subr.mxu0 0.0
        %1371 = vmatpush1.xpose.msra.mxu0 0.0
        %1372 = vmatprep.subr.mxu0 0.0
        %1373 = vmatpush1.xpose.msra.mxu0 0.0
        %1374 = vmatprep.subr.mxu0 0.0
        %1375 = vmatpush1.xpose.msra.mxu0 0.0
        %1376 = vmatprep.subr.mxu0 0.0
        %1377 = vmatpush1.xpose.msra.mxu0 0.0
        %1378 = vmatprep.subr.mxu0 0.0
        %1379 = vmatpush1.xpose.msra.mxu0 0.0
        %1380 = vmatprep.subr.mxu0 0.0
        %1381 = vmatpush1.xpose.msra.mxu0 0.0
        %1382 = vmatprep.subr.mxu0 0.0
        %1383 = vmatpush1.xpose.msra.mxu0 0.0
        %1384 = vmatprep.subr.mxu0 0.0
        %1385 = vmatpush1.xpose.msra.mxu0 0.0
        %1386 = vmatprep.subr.mxu0 0.0
        %1387 = vmatpush1.xpose.msra.mxu0 0.0
        %1388 = vmatprep.subr.mxu0 0.0
        %1389 = vmatpush1.xpose.msra.mxu0 0.0
        %1390 = vmatprep.subr.mxu0 0.0
        %1391 = vmatpush1.xpose.msra.mxu0 0.0
        %1392 = vmatprep.mubr.f32.mxu0 0.0
        %1393 = vmatmul.mubr.f32.gmra.mrb[0].mxu0 %v1323
        %v1394 = vpop.f32.mrb[0].mxu0
        %v1395 = vadd.f32 0.0, %v1394
        %v1396 = vpop.f32.mrb[0].mxu0
        %1397 = vdwg.mxu0
        %1398 = vxpose.xlu0.b32.start [1/16] %v1167, 128
        %1399 = vxpose.xlu0.b32.cont [2/16] 0.0, 128
        %1400 = vxpose.xlu0.b32.cont [3/16] 0.0, 128
        %1401 = vxpose.xlu0.b32.cont [4/16] 0.0, 128
        %1402 = vxpose.xlu0.b32.cont [5/16] 0.0, 128
        %1403 = vxpose.xlu0.b32.cont [6/16] 0.0, 128
        %1404 = vxpose.xlu0.b32.cont [7/16] 0.0, 128
        %1405 = vxpose.xlu0.b32.cont [8/16] 0.0, 128
        %1406 = vxpose.xlu0.b32.cont [9/16] 0.0, 128
        %1407 = vxpose.xlu0.b32.cont [10/16] 0.0, 128
        %1408 = vxpose.xlu0.b32.cont [11/16] 0.0, 128
        %1409 = vxpose.xlu0.b32.cont [12/16] 0.0, 128
        %1410 = vxpose.xlu0.b32.cont [13/16] 0.0, 128
        %1411 = vxpose.xlu0.b32.cont [14/16] 0.0, 128
        %1412 = vxpose.xlu0.b32.cont [15/16] 0.0, 128
        %1413 = vxpose.xlu0.b32.end [16/16] 0.0, 128
        %v1414 = vpop.trf.xlu0
        %v1415 = vpop.trf.xlu0
        %v1416 = vpop.trf.xlu0
        %v1417 = vpop.trf.xlu0
        %v1418 = vpop.trf.xlu0
        %v1419 = vpop.trf.xlu0
        %v1420 = vpop.trf.xlu0
        %v1421 = vpop.trf.xlu0
        %v1422 = vpop.trf.xlu0
        %v1423 = vpop.trf.xlu0
        %v1424 = vpop.trf.xlu0
        %v1425 = vpop.trf.xlu0
        %v1426 = vpop.trf.xlu0
        %v1427 = vpop.trf.xlu0
        %v1428 = vpop.trf.xlu0
        %v1429 = vpop.trf.xlu0
        %1430 = vxpose.xlu0.b32.start [1/16] %v1243, 128
        %1431 = vxpose.xlu0.b32.cont [2/16] 0.0, 128
        %1432 = vxpose.xlu0.b32.cont [3/16] 0.0, 128
        %1433 = vxpose.xlu0.b32.cont [4/16] 0.0, 128
        %1434 = vxpose.xlu0.b32.cont [5/16] 0.0, 128
        %1435 = vxpose.xlu0.b32.cont [6/16] 0.0, 128
        %1436 = vxpose.xlu0.b32.cont [7/16] 0.0, 128
        %1437 = vxpose.xlu0.b32.cont [8/16] 0.0, 128
        %1438 = vxpose.xlu0.b32.cont [9/16] 0.0, 128
        %1439 = vxpose.xlu0.b32.cont [10/16] 0.0, 128
        %1440 = vxpose.xlu0.b32.cont [11/16] 0.0, 128
        %1441 = vxpose.xlu0.b32.cont [12/16] 0.0, 128
        %1442 = vxpose.xlu0.b32.cont [13/16] 0.0, 128
        %1443 = vxpose.xlu0.b32.cont [14/16] 0.0, 128
        %1444 = vxpose.xlu0.b32.cont [15/16] 0.0, 128
        %1445 = vxpose.xlu0.b32.end [16/16] 0.0, 128
        %v1446 = vpop.trf.xlu0
        %v1447 = vpop.trf.xlu0
        %v1448 = vpop.trf.xlu0
        %v1449 = vpop.trf.xlu0
        %v1450 = vpop.trf.xlu0
        %v1451 = vpop.trf.xlu0
        %v1452 = vpop.trf.xlu0
        %v1453 = vpop.trf.xlu0
        %v1454 = vpop.trf.xlu0
        %v1455 = vpop.trf.xlu0
        %v1456 = vpop.trf.xlu0
        %v1457 = vpop.trf.xlu0
        %v1458 = vpop.trf.xlu0
        %v1459 = vpop.trf.xlu0
        %v1460 = vpop.trf.xlu0
        %v1461 = vpop.trf.xlu0
        %1462 = vxpose.xlu0.b32.start [1/16] %v1319, 128
        %1463 = vxpose.xlu0.b32.cont [2/16] 0.0, 128
        %1464 = vxpose.xlu0.b32.cont [3/16] 0.0, 128
        %1465 = vxpose.xlu0.b32.cont [4/16] 0.0, 128
        %1466 = vxpose.xlu0.b32.cont [5/16] 0.0, 128
        %1467 = vxpose.xlu0.b32.cont [6/16] 0.0, 128
        %1468 = vxpose.xlu0.b32.cont [7/16] 0.0, 128
        %1469 = vxpose.xlu0.b32.cont [8/16] 0.0, 128
        %1470 = vxpose.xlu0.b32.cont [9/16] 0.0, 128
        %1471 = vxpose.xlu0.b32.cont [10/16] 0.0, 128
        %1472 = vxpose.xlu0.b32.cont [11/16] 0.0, 128
        %1473 = vxpose.xlu0.b32.cont [12/16] 0.0, 128
        %1474 = vxpose.xlu0.b32.cont [13/16] 0.0, 128
        %1475 = vxpose.xlu0.b32.cont [14/16] 0.0, 128
        %1476 = vxpose.xlu0.b32.cont [15/16] 0.0, 128
        %1477 = vxpose.xlu0.b32.end [16/16] 0.0, 128
        %v1478 = vpop.trf.xlu0
        %v1479 = vpop.trf.xlu0
        %v1480 = vpop.trf.xlu0
        %v1481 = vpop.trf.xlu0
        %v1482 = vpop.trf.xlu0
        %v1483 = vpop.trf.xlu0
        %v1484 = vpop.trf.xlu0
        %v1485 = vpop.trf.xlu0
        %v1486 = vpop.trf.xlu0
        %v1487 = vpop.trf.xlu0
        %v1488 = vpop.trf.xlu0
        %v1489 = vpop.trf.xlu0
        %v1490 = vpop.trf.xlu0
        %v1491 = vpop.trf.xlu0
        %v1492 = vpop.trf.xlu0
        %v1493 = vpop.trf.xlu0
        %1494 = vxpose.xlu0.b32.start [1/16] %v1395, 128
        %1495 = vxpose.xlu0.b32.cont [2/16] 0.0, 128
        %1496 = vxpose.xlu0.b32.cont [3/16] 0.0, 128
        %1497 = vxpose.xlu0.b32.cont [4/16] 0.0, 128
        %1498 = vxpose.xlu0.b32.cont [5/16] 0.0, 128
        %1499 = vxpose.xlu0.b32.cont [6/16] 0.0, 128
        %1500 = vxpose.xlu0.b32.cont [7/16] 0.0, 128
        %1501 = vxpose.xlu0.b32.cont [8/16] 0.0, 128
        %1502 = vxpose.xlu0.b32.cont [9/16] 0.0, 128
        %1503 = vxpose.xlu0.b32.cont [10/16] 0.0, 128
        %1504 = vxpose.xlu0.b32.cont [11/16] 0.0, 128
        %1505 = vxpose.xlu0.b32.cont [12/16] 0.0, 128
        %1506 = vxpose.xlu0.b32.cont [13/16] 0.0, 128
        %1507 = vxpose.xlu0.b32.cont [14/16] 0.0, 128
        %1508 = vxpose.xlu0.b32.cont [15/16] 0.0, 128
        %1509 = vxpose.xlu0.b32.end [16/16] 0.0, 128
        %v1510 = vpop.trf.xlu0
        %v1511 = vpop.trf.xlu0
        %v1512 = vpop.trf.xlu0
        %v1513 = vpop.trf.xlu0
        %v1514 = vpop.trf.xlu0
        %v1515 = vpop.trf.xlu0
        %v1516 = vpop.trf.xlu0
        %v1517 = vpop.trf.xlu0
        %v1518 = vpop.trf.xlu0
        %v1519 = vpop.trf.xlu0
        %v1520 = vpop.trf.xlu0
        %v1521 = vpop.trf.xlu0
        %v1522 = vpop.trf.xlu0
        %v1523 = vpop.trf.xlu0
        %v1524 = vpop.trf.xlu0
        %v1525 = vpop.trf.xlu0
        %v1526 = vcombine.low %v1414, %v1478
        %v1527 = vcombine.high %v1414, %v1478
        %v1529 = vunpack.c.l.s4 1983009808
        %v1530 = vunpack.c.0.s8 %v1529
        %v1531 = vlaneseq
        %v1532 = vshrl.u32 %v1531, 7
        %v1533 = vsub.s32 %v1530, %v1532
        %v1534 = vrot.slane %v1526, %v1533
        %v1536 = vunpack.c.l.s4 1983009808
        %v1537 = vunpack.c.0.s8 %v1536
        %v1538 = vlaneseq
        %v1539 = vshrl.u32 %v1538, 7
        %v1540 = vsub.s32 %v1537, %v1539
        %v1541 = vrot.slane %v1527, %v1540
        %v1542 = vcombine.low %v1446, %v1510
        %v1543 = vcombine.high %v1446, %v1510
        %v1545 = vunpack.c.l.s4 1983009808
        %v1546 = vunpack.c.0.s8 %v1545
        %v1547 = vlaneseq
        %v1548 = vshrl.u32 %v1547, 7
        %v1549 = vsub.s32 %v1546, %v1548
        %v1550 = vrot.slane %v1542, %v1549
        %v1552 = vunpack.c.l.s4 1983009808
        %v1553 = vunpack.c.0.s8 %v1552
        %v1554 = vlaneseq
        %v1555 = vshrl.u32 %v1554, 7
        %v1556 = vsub.s32 %v1553, %v1555
        %v1557 = vrot.slane %v1543, %v1556
        %v1558 = vcombine.low %v1534, %v1550
        %v1559 = vcombine.high %v1534, %v1550
        %v1561 = vunpack.c.l.s4 1934713408
        %v1562 = vunpack.c.0.s8 %v1561
        %v1563 = vlaneseq
        %v1564 = vshrl.u32 %v1563, 7
        %v1565 = vsub.s32 %v1562, %v1564
        %v1566 = vrot.slane %v1558, %v1565
        %v1568 = vunpack.c.l.s4 1934713408
        %v1569 = vunpack.c.0.s8 %v1568
        %v1570 = vlaneseq
        %v1571 = vshrl.u32 %v1570, 7
        %v1572 = vsub.s32 %v1569, %v1571
        %v1573 = vrot.slane %v1559, %v1572
        %v1574 = vcombine.low %v1541, %v1557
        %v1575 = vcombine.high %v1541, %v1557
        %v1577 = vunpack.c.l.s4 1934713408
        %v1578 = vunpack.c.0.s8 %v1577
        %v1579 = vlaneseq
        %v1580 = vshrl.u32 %v1579, 7
        %v1581 = vsub.s32 %v1578, %v1580
        %v1582 = vrot.slane %v1574, %v1581
        %v1584 = vunpack.c.l.s4 1934713408
        %v1585 = vunpack.c.0.s8 %v1584
        %v1586 = vlaneseq
        %v1587 = vshrl.u32 %v1586, 7
        %v1588 = vsub.s32 %v1585, %v1587
        %v1589 = vrot.slane %v1575, %v1588
        %v1590 = vcombine.high %v1566, 0.0
        %v1591 = vcombine.high %v1573, 0.0
        %v1592 = vcombine.high %v1582, 0.0
        %v1593 = vcombine.high %v1589, 0.0
        %v1594 = vcombine.low %v1566, %v1573
        %v1596 = vunpack.c.l.s4 1983009808
        %v1597 = vunpack.c.0.s8 %v1596
        %v1598 = vlaneseq
        %v1599 = vshrl.u32 %v1598, 7
        %v1600 = vsub.s32 %v1597, %v1599
        %v1601 = vrot.slane %v1594, %v1600
        %v1602 = vcombine.low %v1590, %v1591
        %v1604 = vunpack.c.l.s4 1983009808
        %v1605 = vunpack.c.0.s8 %v1604
        %v1606 = vlaneseq
        %v1607 = vshrl.u32 %v1606, 7
        %v1608 = vsub.s32 %v1605, %v1607
        %v1609 = vrot.slane %v1602, %v1608
        %v1610 = vcombine.low %v1582, %v1589
        %v1612 = vunpack.c.l.s4 1983009808
        %v1613 = vunpack.c.0.s8 %v1612
        %v1614 = vlaneseq
        %v1615 = vshrl.u32 %v1614, 7
        %v1616 = vsub.s32 %v1613, %v1615
        %v1617 = vrot.slane %v1610, %v1616
        %v1618 = vcombine.low %v1592, %v1593
        %v1620 = vunpack.c.l.s4 1983009808
        %v1621 = vunpack.c.0.s8 %v1620
        %v1622 = vlaneseq
        %v1623 = vshrl.u32 %v1622, 7
        %v1624 = vsub.s32 %v1621, %v1623
        %v1625 = vrot.slane %v1618, %v1624
        %v1626 = vcombine.low %v1601, %v1609
        %v1627 = vcombine.high %v1601, %v1609
        %v1629 = vunpack.c.l.s4 1934713408
        %v1630 = vunpack.c.0.s8 %v1629
        %v1631 = vlaneseq
        %v1632 = vshrl.u32 %v1631, 7
        %v1633 = vsub.s32 %v1630, %v1632
        %v1634 = vrot.slane %v1626, %v1633
        %v1636 = vunpack.c.l.s4 1934713408
        %v1637 = vunpack.c.0.s8 %v1636
        %v1638 = vlaneseq
        %v1639 = vshrl.u32 %v1638, 7
        %v1640 = vsub.s32 %v1637, %v1639
        %v1641 = vrot.slane %v1627, %v1640
        %v1642 = vcombine.low %v1617, %v1625
        %v1643 = vcombine.high %v1617, %v1625
        %v1645 = vunpack.c.l.s4 1934713408
        %v1646 = vunpack.c.0.s8 %v1645
        %v1647 = vlaneseq
        %v1648 = vshrl.u32 %v1647, 7
        %v1649 = vsub.s32 %v1646, %v1648
        %v1650 = vrot.slane %v1642, %v1649
        %v1652 = vunpack.c.l.s4 1934713408
        %v1653 = vunpack.c.0.s8 %v1652
        %v1654 = vlaneseq
        %v1655 = vshrl.u32 %v1654, 7
        %v1656 = vsub.s32 %v1653, %v1655
        %v1657 = vrot.slane %v1643, %v1656
        %v1658 = vcombine.low %v1634, %v1650
        %v1659 = vcombine.high %v1634, %v1650
        %v1660 = vcombine.low %v1641, %v1657
        %v1661 = vcombine.high %v1641, %v1657
        %1663 = vrot.lane.b32.xlu0 %v1659, 8
        %v1664 = vpop.permute.xlu0 %1663
        %1667 = vrot.lane.b32.xlu0 %v1660, 16
        %v1668 = vpop.permute.xlu0 %1667
        %1671 = vrot.lane.b32.xlu0 %v1661, 24
        %v1672 = vpop.permute.xlu0 %1671
        %v1674 = vsel %vm609, %v1658, %v1664
        %vm1675 = vcmask 130048
        %v1676 = vsel %vm1675, %v1674, %v1668
        %vm1677 = vcmask 195584
        %v1678 = vsel %vm1677, %v1676, %v1672
        %v1679 = vld [vmem:[#allocation8] sm:$0xff]
        %v1680 = vld [vmem:[#allocation8 + $0x8] sm:$0xff]
        %v1681 = vld [vmem:[#allocation8 + $0x10] sm:$0xff]
        %v1682 = vld [vmem:[#allocation8 + $0x18] sm:$0xff]
        %v1683 = vld [vmem:[%s4] sm:$0x1]
        %v1685 = vlaneseq
        %v1686 = vshrl.u32 %v1685, 7
        %v1687 = vsub.s32 0, %v1686
        %v1688 = vrot.slane %v1683, %v1687
        %vm1690 = vcmask 261120
        %v1692 = vsel %vm1690, %v1678, 0
        %1694 = vmatprep.subr.mxu0 0.0
        %1695 = vmatpush1.msra.mxu0 %v1679
        %1696 = vmatprep.subr.mxu0 0.0
        %1697 = vmatpush1.msra.mxu0 %v1680
        %1698 = vmatprep.subr.mxu0 0.0
        %1699 = vmatpush1.msra.mxu0 %v1681
        %1700 = vmatprep.subr.mxu0 0.0
        %1701 = vmatpush1.msra.mxu0 %v1682
        %1702 = vmatprep.subr.mxu0 0.0
        %1703 = vmatpush1.msra.mxu0 0.0
        %1704 = vmatprep.subr.mxu0 0.0
        %1705 = vmatpush1.msra.mxu0 0.0
        %1706 = vmatprep.subr.mxu0 0.0
        %1707 = vmatpush1.msra.mxu0 0.0
        %1708 = vmatprep.subr.mxu0 0.0
        %1709 = vmatpush1.msra.mxu0 0.0
        %1710 = vmatprep.subr.mxu0 0.0
        %1711 = vmatpush1.msra.mxu0 0.0
        %1712 = vmatprep.subr.mxu0 0.0
        %1713 = vmatpush1.msra.mxu0 0.0
        %1714 = vmatprep.subr.mxu0 0.0
        %1715 = vmatpush1.msra.mxu0 0.0
        %1716 = vmatprep.subr.mxu0 0.0
        %1717 = vmatpush1.msra.mxu0 0.0
        %1718 = vmatprep.subr.mxu0 0.0
        %1719 = vmatpush1.msra.mxu0 0.0
        %1720 = vmatprep.subr.mxu0 0.0
        %1721 = vmatpush1.msra.mxu0 0.0
        %1722 = vmatprep.subr.mxu0 0.0
        %1723 = vmatpush1.msra.mxu0 0.0
        %1724 = vmatprep.subr.mxu0 0.0
        %1725 = vmatpush1.msra.mxu0 0.0
        %1726 = vmatprep.subr.mxu0 0.0
        %1727 = vmatpush1.msra.mxu0 0.0
        %1728 = vmatprep.subr.mxu0 0.0
        %1729 = vmatpush1.msra.mxu0 0.0
        %1730 = vmatprep.subr.mxu0 0.0
        %1731 = vmatpush1.msra.mxu0 0.0
        %1732 = vmatprep.subr.mxu0 0.0
        %1733 = vmatpush1.msra.mxu0 0.0
        %1734 = vmatprep.subr.mxu0 0.0
        %1735 = vmatpush1.msra.mxu0 0.0
        %1736 = vmatprep.subr.mxu0 0.0
        %1737 = vmatpush1.msra.mxu0 0.0
        %1738 = vmatprep.subr.mxu0 0.0
        %1739 = vmatpush1.msra.mxu0 0.0
        %1740 = vmatprep.subr.mxu0 0.0
        %1741 = vmatpush1.msra.mxu0 0.0
        %1742 = vmatprep.subr.mxu0 0.0
        %1743 = vmatpush1.msra.mxu0 0.0
        %1744 = vmatprep.subr.mxu0 0.0
        %1745 = vmatpush1.msra.mxu0 0.0
        %1746 = vmatprep.subr.mxu0 0.0
        %1747 = vmatpush1.msra.mxu0 0.0
        %1748 = vmatprep.subr.mxu0 0.0
        %1749 = vmatpush1.msra.mxu0 0.0
        %1750 = vmatprep.subr.mxu0 0.0
        %1751 = vmatpush1.msra.mxu0 0.0
        %1752 = vmatprep.subr.mxu0 0.0
        %1753 = vmatpush1.msra.mxu0 0.0
        %1754 = vmatprep.subr.mxu0 0.0
        %1755 = vmatpush1.msra.mxu0 0.0
        %1756 = vmatprep.subr.mxu0 0.0
        %1757 = vmatpush1.msra.mxu0 0.0
        %1758 = vmatprep.mubr.f32.mxu0 0.0
        %1759 = vmatmul.mubr.f32.gmra.mrb[0].mxu0 %v1692
        %v1760 = vpop.f32.mrb[0].mxu0
        %v1761 = vadd.f32 %v1688, %v1760
        %v1762 = vpop.f32.mrb[0].mxu0
        %1763 = vdwg.mxu0
        %1764 = vst.msk [vmem:[%s344] sm:$0xff] %vm1690, %v1761
        %v1765 = vsel %vm609, %v942, 0.0
        %v1766 = vsel %vm609, %v943, 0.0
        %v1767 = vadd.f32 %v1765, %v1766
        %v1768 = vsel %vm609, %v944, 0.0
        %v1769 = vadd.f32 %v1767, %v1768
        %v1770 = vsel %vm609, %v945, 0.0
        %v1771 = vadd.f32 %v1769, %v1770
        %1772 = vst.msk [vmem:[%s351] sm:$0xff] %vm609, %v1771
        %v1773 = vsel %vm946, 1, 0
        %v1774 = vsel %vm947, 1, 0
        %v1775 = vsel %vm948, 1, 0
        %v1776 = vsel %vm949, 1, 0
        %v1777 = vcvt.s32.f32 %v1773
        %v1778 = vcvt.s32.f32 %v1774
        %v1779 = vcvt.s32.f32 %v1775
        %v1780 = vcvt.s32.f32 %v1776
        %v1781 = vsel %vm609, %v1777, 0.0
        %v1782 = vsel %vm609, %v1778, 0.0
        %v1783 = vadd.f32 %v1781, %v1782
        %v1784 = vsel %vm609, %v1779, 0.0
        %v1785 = vadd.f32 %v1783, %v1784
        %v1786 = vsel %vm609, %v1780, 0.0
        %v1787 = vadd.f32 %v1785, %v1786
        %1788 = vst.msk [vmem:[%s358] sm:$0xff] %vm609, %v1787
        %s1789 = sand.u32 %s161, 1
        %s1790 = scalar_lea.sflag [#allocation5], %s1789
        %s1791 = sand.u32 %s161, 1
        %s1792 = smul.addr %s1791, 8
        %s1793 = scalar_lea.vmem [#allocation9], %s1792
        %s1794 = sand.u32 %s29, 1
        %s1795 = scalar_lea.sflag [#allocation11], %s1794
        %s1796 = sand.u32 %s189, 1
        %s1797 = smul.addr %s1796, 8
        %s1798 = scalar_lea.vmem [#allocation10], %s1797
        %s1799 = sand.u32 %s29, 1
        %s1800 = scalar_lea.sflag [#allocation11], %s1799
        %s1801 = sand.u32 %s217, 1
        %s1802 = smul.addr %s1801, 8
        %s1803 = scalar_lea.vmem [#allocation12], %s1802
        // Predicated region
        $region57: #{tpu_custom_call.1} parent=39 // pred_check
          %p1804 = pneg %p171
        $region58: #{tpu_custom_call.1} parent=39 // pred_check_branch
          %1806 = sbr.rel (%p1804) target = $region60
        $region59: #{tpu_custom_call.1} parent=39 // pred_region
          %s1808 = ssub.s32 128, 128
          %1809 = vsyncadd %s1790, %s1808
          %s1810 = sadd.s32 %s34, %s33
          %s1811 = smul.addr %s1810, 128
          %s1812 = scalar_lea.hbm %s5, %s1811
          %s1814 = sshll.u32 %s1793, 4
          %s1815 = int_to_ptr.vmem [resolvable:$true] %s1814
          %1817 = dma.vmem_to_hbm [thread:$0]  %s1815, 128, %s1812, %s1790
        $region60: #{tpu_custom_call.1} parent=39 // pred_fallthru
          _
        // Predicated region
        $region61: #{tpu_custom_call.1} parent=39 // pred_check
          %p1818 = pneg %p199
        $region62: #{tpu_custom_call.1} parent=39 // pred_check_branch
          %1820 = sbr.rel (%p1818) target = $region64
        $region63: #{tpu_custom_call.1} parent=39 // pred_region
          %s1822 = ssub.s32 128, 128
          %1823 = vsyncadd %s1795, %s1822
          %s1824 = sadd.s32 %s34, %s33
          %s1825 = smul.addr %s1824, 128
          %s1826 = scalar_lea.hbm %s6, %s1825
          %s1828 = sshll.u32 %s1798, 4
          %s1829 = int_to_ptr.vmem [resolvable:$true] %s1828
          %1831 = dma.vmem_to_hbm [thread:$0]  %s1829, 128, %s1826, %s1795
        $region64: #{tpu_custom_call.1} parent=39 // pred_fallthru
          _
        // Predicated region
        $region65: #{tpu_custom_call.1} parent=39 // pred_check
          %p1832 = pneg %p227
        $region66: #{tpu_custom_call.1} parent=39 // pred_check_branch
          %1834 = sbr.rel (%p1832) target = $region68
        $region67: #{tpu_custom_call.1} parent=39 // pred_region
          %s1836 = ssub.s32 128, 128
          %1837 = vsyncadd %s1800, %s1836
          %s1838 = sadd.s32 %s34, %s33
          %s1839 = smul.addr %s1838, 128
          %s1840 = scalar_lea.hbm %s7, %s1839
          %s1842 = sshll.u32 %s1803, 4
          %s1843 = int_to_ptr.vmem [resolvable:$true] %s1842
          %1845 = dma.vmem_to_hbm [thread:$0]  %s1843, 128, %s1840, %s1800
        $region68: #{tpu_custom_call.1} parent=39 // pred_fallthru
          _
      $region40: #{tpu_custom_call.1} parent=5 // pred_fallthru
        _
      %p1846 = scmp.le.s32.totalorder 2, %s24
      // Predicated region
      $region69: #{tpu_custom_call.1} parent=5 // pred_check
        %p1847 = pneg %p1846
      $region70: #{tpu_custom_call.1} parent=5 // pred_check_branch
        %1849 = sbr.rel (%p1847) target = $region72
      $region71: #{tpu_custom_call.1} parent=5 // pred_region
        %s1850 = ssub.s32 %s24, 2
        // Predicated region
        $region73: #{tpu_custom_call.1} parent=71 // pred_check
          %p1851 = pneg %p177
        $region74: #{tpu_custom_call.1} parent=71 // pred_check_branch
          %1853 = sbr.rel (%p1851) target = $region76
        $region75: #{tpu_custom_call.1} parent=71 // pred_region
          %s1854 = sand.u32 %s162, 1
          %s1855 = scalar_lea.sflag [#allocation5], %s1854
          %s1856 = sand.u32 %s162, 1
          %s1857 = smul.addr %s1856, 8
          %s1858 = scalar_lea.vmem [#allocation9], %s1857
          %1859 = dma.done %s1855, 128
        $region76: #{tpu_custom_call.1} parent=71 // pred_fallthru
          _
        // Predicated region
        $region77: #{tpu_custom_call.1} parent=71 // pred_check
          %p1860 = pneg %p205
        $region78: #{tpu_custom_call.1} parent=71 // pred_check_branch
          %1862 = sbr.rel (%p1860) target = $region80
        $region79: #{tpu_custom_call.1} parent=71 // pred_region
          %s1863 = sand.u32 %s30, 1
          %s1864 = scalar_lea.sflag [#allocation11], %s1863
          %s1865 = sand.u32 %s190, 1
          %s1866 = smul.addr %s1865, 8
          %s1867 = scalar_lea.vmem [#allocation10], %s1866
          %1868 = dma.done %s1864, 128
        $region80: #{tpu_custom_call.1} parent=71 // pred_fallthru
          _
        // Predicated region
        $region81: #{tpu_custom_call.1} parent=71 // pred_check
          %p1869 = pneg %p233
        $region82: #{tpu_custom_call.1} parent=71 // pred_check_branch
          %1871 = sbr.rel (%p1869) target = $region84
        $region83: #{tpu_custom_call.1} parent=71 // pred_region
          %s1872 = sand.u32 %s30, 1
          %s1873 = scalar_lea.sflag [#allocation11], %s1872
          %s1874 = sand.u32 %s218, 1
          %s1875 = smul.addr %s1874, 8
          %s1876 = scalar_lea.vmem [#allocation12], %s1875
          %1877 = dma.done %s1873, 128
        $region84: #{tpu_custom_call.1} parent=71 // pred_fallthru
          _
      $region72: #{tpu_custom_call.1} parent=5 // pred_fallthru
        _
    $region6: #{tpu_custom_call.1} parent=1 // loop_footer
      %s28 = sadd.s32 1, %s24
    $region7: #{tpu_custom_call.1} parent=1 // loop_footer_branch
      %23 = sbr.rel target = $region3
    $region8: #{tpu_custom_call.1} parent=1 // loop_exit
      _
    %1878 = vsyncpa [#allocation4], 1
    %s1879 = scalar_lea.sflag [#allocation4], 1
    %1880 = vsyncpa %s1879, 1
    %1881 = vsyncpa [#allocation7], 1
    %1882 = vsyncpa [#allocation5], 1
    %s1883 = scalar_lea.sflag [#allocation5], 1
    %1884 = vsyncpa %s1883, 1
    %1885 = vsyncpa [#allocation11], 1
    %s1886 = scalar_lea.sflag [#allocation11], 1
    %1887 = vsyncpa %s1886, 1

</llo_original>
